<compile_context>
chip_gen: v6e
topology: v6e:2x2x1
jax: 0.10.0
libtpu: 0.0.40
codegen_flags: <defaults>
</compile_context>

<pallas_src>
import jax
import jax.numpy as jnp
from jax.experimental import pallas as pl
from jax.experimental.pallas import tpu as pltpu

K_IN = 784           # 28 * 28
K_PAD = 896          # 7 * 128, zero-padded feature dim
TILE_M_MAX = 1024    # safe on v5e/v6e/v7x VMEM budgets (~6 MiB live at bf16)


def _mlp_kernel(x_ref, w1_ref, b1_ref, w2_ref, b2_ref, w3_ref, b3_ref, o_ref):
    # Layer 1: (TILE_M, 896) bf16 @ (896, 256) bf16 -> f32 accumulate, bias+ReLU.
    h1 = jnp.dot(x_ref[...], w1_ref[...], preferred_element_type=jnp.float32)
    h1 = jnp.maximum(h1 + b1_ref[...], 0.0)
    # Layer 2: (TILE_M, 256) bf16 @ (256, 128) bf16 -> f32, bias+ReLU.
    h2 = jnp.dot(h1.astype(jnp.bfloat16), w2_ref[...],
                 preferred_element_type=jnp.float32)
    h2 = jnp.maximum(h2 + b2_ref[...], 0.0)
    # Layer 3 (out_features == 1): VPU multiply + lane reduction instead of an
    # N=1 MXU matmul; b3 is a scalar read from SMEM.
    out = jnp.sum(h2 * w3_ref[...], axis=-1) + b3_ref[0, 0]   # (TILE_M,)
    # Lane-dense store: one (1, TILE_M) row per grid step.
    o_ref[...] = out[None, :].astype(o_ref.dtype)


def discriminator_forward(x, params):
    """x: (B, C, H, W) with H*W == 784.  Returns (B, C, 1) float32."""
    w1, b1, w2, b2, w3, b3 = params
    B, C, H, W = x.shape
    assert H * W == K_IN, "Discriminator expects 28x28 spatial input"
    M = B * C

    # Row tiling: biggest tile up to TILE_M_MAX, multiple of 128.
    if M > TILE_M_MAX:
        tile_m = TILE_M_MAX
    else:
        tile_m = max(128, ((M + 127) // 128) * 128)
    m_pad = ((M + tile_m - 1) // tile_m) * tile_m
    num_tiles = m_pad // tile_m

    # Activations: flatten, zero-pad rows (to m_pad) and features (to 896),
    # cast to bf16 for the MXU.
    x2d = x.reshape(M, K_IN).astype(jnp.float32)
    x2d = jnp.pad(x2d, ((0, m_pad - M), (0, K_PAD - K_IN))).astype(jnp.bfloat16)

    # Weights: zero-pad w1's K dim (no effect on the product), cast bf16.
    w1p = jnp.pad(w1.astype(jnp.float32),
                  ((0, K_PAD - K_IN), (0, 0))).astype(jnp.bfloat16)   # (896, 256)
    w2p = w2.astype(jnp.bfloat16)                                      # (256, 128)
    w3row = w3.reshape(1, -1).astype(jnp.float32)                      # (1, 128)
    b1r = b1.reshape(1, -1).astype(jnp.float32)                        # (1, 256)
    b2r = b2.reshape(1, -1).astype(jnp.float32)                        # (1, 128)
    b3s = b3.reshape(1, 1).astype(jnp.float32)                         # (1, 1) scalar

    out = pl.pallas_call(
        _mlp_kernel,
        out_shape=jax.ShapeDtypeStruct((num_tiles, tile_m), jnp.float32),
        grid=(num_tiles,),
        in_specs=[
            pl.BlockSpec((tile_m, K_PAD), lambda i: (i, 0)),     # x tile
            pl.BlockSpec((K_PAD, 256), lambda i: (0, 0)),        # w1 (resident)
            pl.BlockSpec((1, 256), lambda i: (0, 0)),            # b1
            pl.BlockSpec((256, 128), lambda i: (0, 0)),          # w2
            pl.BlockSpec((1, 128), lambda i: (0, 0)),            # b2
            pl.BlockSpec((1, 128), lambda i: (0, 0)),            # w3 row
            pl.BlockSpec(memory_space=pltpu.MemorySpace.SMEM),   # b3 scalar
        ],
        out_specs=pl.BlockSpec((1, tile_m), lambda i: (i, 0)),
        compiler_params=pltpu.CompilerParams(
            dimension_semantics=("parallel",),
        ),
    )(x2d, w1p, b1r, w2p, b2r, w3row, b3s)

    return out.reshape(m_pad)[:M].reshape(B, C, 1)


def init_params(key):
    """PyTorch-Linear-style init (U(-1/sqrt(fan_in), 1/sqrt(fan_in))).

    Weights stored as (in, out); biases as (1, out)."""
    dims = [(784, 256), (256, 128), (128, 1)]
    params = []
    for fan_in, fan_out in dims:
        kw, kb, key = jax.random.split(key, 3)
        bound = 1.0 / (fan_in ** 0.5)
        w = jax.random.uniform(kw, (fan_in, fan_out), jnp.float32, -bound, bound)
        b = jax.random.uniform(kb, (1, fan_out), jnp.float32, -bound, bound)
        params += [w, b]
    return tuple(params)


def _reference_forward(x, params):
    """Pure-JAX reference with the same bf16-in / f32-accumulate precision."""
    w1, b1, w2, b2, w3, b3 = params
    B, C, H, W = x.shape
    h = x.reshape(B, C, H * W).astype(jnp.bfloat16)
    h = jnp.dot(h, w1.astype(jnp.bfloat16), preferred_element_type=jnp.float32)
    h = jnp.maximum(h + b1.reshape(1, 1, -1), 0.0)
    h = jnp.dot(h.astype(jnp.bfloat16), w2.astype(jnp.bfloat16),
                preferred_element_type=jnp.float32)
    h = jnp.maximum(h + b2.reshape(1, 1, -1), 0.0)
    out = jnp.dot(h, w3.astype(jnp.float32), preferred_element_type=jnp.float32)
    return out + b3.reshape(1, 1, 1)


if __name__ == "__main__":
    key = jax.random.PRNGKey(0)
    k_x, k_p = jax.random.split(key)

    # Small, shape-consistent input: batch=2, channels=1, 28x28 images (NCHW).
    x = jax.random.normal(k_x, (2, 1, 28, 28), jnp.float32)
    params = init_params(k_p)

    y = discriminator_forward(x, params)
    y = jax.block_until_ready(y)

    y_ref = _reference_forward(x, params)
    assert y.shape == (2, 1, 1), y.shape
    assert jnp.allclose(y, y_ref, atol=2e-3, rtol=2e-3), "mismatch vs reference"

    print("KERNEL_OK")
</pallas_src>

<mosaic_0001>
module attributes {stable_mosaic.version = 11 : i64} {
  func.func @_mlp_kernel(%arg0: i32, %arg1: memref<128x896xbf16, #tpu.memory_space<vmem>>, %arg2: memref<896x256xbf16, #tpu.memory_space<vmem>>, %arg3: memref<1x256xf32, #tpu.memory_space<vmem>>, %arg4: memref<256x128xbf16, #tpu.memory_space<vmem>>, %arg5: memref<1x128xf32, #tpu.memory_space<vmem>>, %arg6: memref<1x128xf32, #tpu.memory_space<vmem>>, %arg7: memref<1x1xf32, #tpu.memory_space<smem>>, %arg8: memref<1x128xf32, #tpu.memory_space<vmem>>) attributes {dimension_semantics = [#tpu.dimension_semantics<parallel>], iteration_bounds = array<i64: 1>, scalar_prefetch = 0 : i64, scratch_operands = 0 : i64, tpu.core_type = #tpu.core_type<tc>, window_params = [{transform_indices = @transform_0, window_bounds = array<i64: 128, 896>}, {pipeline_mode = #tpu.pipeline_mode<synchronous>, transform_indices = @transform_1, window_bounds = array<i64: 896, 256>}, {pipeline_mode = #tpu.pipeline_mode<synchronous>, transform_indices = @transform_2, window_bounds = array<i64: 1, 256>}, {pipeline_mode = #tpu.pipeline_mode<synchronous>, transform_indices = @transform_3, window_bounds = array<i64: 256, 128>}, {pipeline_mode = #tpu.pipeline_mode<synchronous>, transform_indices = @transform_4, window_bounds = array<i64: 1, 128>}, {pipeline_mode = #tpu.pipeline_mode<synchronous>, transform_indices = @transform_5, window_bounds = array<i64: 1, 128>}, {transform_indices = @transform_6, window_bounds = array<i64: 1, 1>}, {transform_indices = @transform_7, window_bounds = array<i64: 1, 128>}]} {
    %c0 = arith.constant 0 : index
    %c0_0 = arith.constant 0 : index
    %0 = vector.load %arg1[%c0, %c0_0] : memref<128x896xbf16, #tpu.memory_space<vmem>>, vector<128x896xbf16>
    %c0_1 = arith.constant 0 : index
    %c0_2 = arith.constant 0 : index
    %1 = vector.load %arg2[%c0_1, %c0_2] : memref<896x256xbf16, #tpu.memory_space<vmem>>, vector<896x256xbf16>
    %cst = arith.constant dense<0.000000e+00> : vector<128x256xf32>
    %2 = tpu.matmul %0, %1, %cst {dimension_numbers = #tpu.dot_dimension_numbers<[1], [0], [0], [1], [0, 0, 1, 1], [], []>} : vector<128x896xbf16>, vector<896x256xbf16>, vector<128x256xf32> -> vector<128x256xf32>
    %c0_3 = arith.constant 0 : index
    %c0_4 = arith.constant 0 : index
    %3 = vector.load %arg3[%c0_3, %c0_4] : memref<1x256xf32, #tpu.memory_space<vmem>>, vector<1x256xf32>
    %4 = vector.broadcast %3 : vector<1x256xf32> to vector<128x256xf32>
    %5 = arith.addf %2, %4 : vector<128x256xf32>
    %cst_5 = arith.constant 0.000000e+00 : f32
    %6 = vector.broadcast %cst_5 : f32 to vector<128x256xf32>
    %7 = arith.maximumf %5, %6 : vector<128x256xf32>
    %8 = arith.truncf %7 : vector<128x256xf32> to vector<128x256xbf16>
    %c0_6 = arith.constant 0 : index
    %c0_7 = arith.constant 0 : index
    %9 = vector.load %arg4[%c0_6, %c0_7] : memref<256x128xbf16, #tpu.memory_space<vmem>>, vector<256x128xbf16>
    %cst_8 = arith.constant dense<0.000000e+00> : vector<128x128xf32>
    %10 = tpu.matmul %8, %9, %cst_8 {dimension_numbers = #tpu.dot_dimension_numbers<[1], [0], [0], [1], [0, 0, 1, 1], [], []>} : vector<128x256xbf16>, vector<256x128xbf16>, vector<128x128xf32> -> vector<128x128xf32>
    %c0_9 = arith.constant 0 : index
    %c0_10 = arith.constant 0 : index
    %11 = vector.load %arg5[%c0_9, %c0_10] : memref<1x128xf32, #tpu.memory_space<vmem>>, vector<1x128xf32>
    %12 = vector.broadcast %11 : vector<1x128xf32> to vector<128x128xf32>
    %13 = arith.addf %10, %12 : vector<128x128xf32>
    %cst_11 = arith.constant 0.000000e+00 : f32
    %14 = vector.broadcast %cst_11 : f32 to vector<128x128xf32>
    %15 = arith.maximumf %13, %14 : vector<128x128xf32>
    %c0_12 = arith.constant 0 : index
    %c0_13 = arith.constant 0 : index
    %16 = vector.load %arg6[%c0_12, %c0_13] : memref<1x128xf32, #tpu.memory_space<vmem>>, vector<1x128xf32>
    %17 = vector.broadcast %16 : vector<1x128xf32> to vector<128x128xf32>
    %18 = arith.mulf %15, %17 : vector<128x128xf32>
    %cst_14 = arith.constant dense<0.000000e+00> : vector<128xf32>
    %19 = vector.multi_reduction <add>, %18, %cst_14 [1] : vector<128x128xf32> to vector<128xf32>
    %c0_15 = arith.constant 0 : index
    %c0_16 = arith.constant 0 : index
    %20 = memref.load %arg7[%c0_15, %c0_16] : memref<1x1xf32, #tpu.memory_space<smem>>
    %21 = vector.broadcast %20 : f32 to vector<128xf32>
    %22 = arith.addf %19, %21 : vector<128xf32>
    %23 = vector.shape_cast %22 : vector<128xf32> to vector<1x128xf32>
    %c0_17 = arith.constant 0 : index
    %c0_18 = arith.constant 0 : index
    %24 = vector.load %arg8[%c0_17, %c0_18] : memref<1x128xf32, #tpu.memory_space<vmem>>, vector<1x128xf32>
    tpu.vector_store %arg8[%c0_17, %c0_18], %23 {strides = array<i32>} : memref<1x128xf32, #tpu.memory_space<vmem>>, vector<1x128xf32>,
    return
  }
  func.func @transform_0(%arg0: i32) -> (i32, i32) {
    %c0_i32 = arith.constant 0 : i32
    %c0_i32_0 = arith.constant 0 : i32
    return %arg0, %c0_i32 : i32, i32
  }
  func.func @transform_1(%arg0: i32) -> (i32, i32) {
    %c0_i32 = arith.constant 0 : i32
    %c0_i32_0 = arith.constant 0 : i32
    %c0_i32_1 = arith.constant 0 : i32
    return %c0_i32, %c0_i32_0 : i32, i32
  }
  func.func @transform_2(%arg0: i32) -> (i32, i32) {
    %c0_i32 = arith.constant 0 : i32
    %c0_i32_0 = arith.constant 0 : i32
    %c0_i32_1 = arith.constant 0 : i32
    return %c0_i32, %c0_i32_0 : i32, i32
  }
  func.func @transform_3(%arg0: i32) -> (i32, i32) {
    %c0_i32 = arith.constant 0 : i32
    %c0_i32_0 = arith.constant 0 : i32
    %c0_i32_1 = arith.constant 0 : i32
    return %c0_i32, %c0_i32_0 : i32, i32
  }
  func.func @transform_4(%arg0: i32) -> (i32, i32) {
    %c0_i32 = arith.constant 0 : i32
    %c0_i32_0 = arith.constant 0 : i32
    %c0_i32_1 = arith.constant 0 : i32
    return %c0_i32, %c0_i32_0 : i32, i32
  }
  func.func @transform_5(%arg0: i32) -> (i32, i32) {
    %c0_i32 = arith.constant 0 : i32
    %c0_i32_0 = arith.constant 0 : i32
    %c0_i32_1 = arith.constant 0 : i32
    return %c0_i32, %c0_i32_0 : i32, i32
  }
  func.func @transform_6(%arg0: i32) -> (i32, i32) {
    %c0_i32 = arith.constant 0 : i32
    %c0_i32_0 = arith.constant 0 : i32
    %c0_i32_1 = arith.constant 0 : i32
    return %c0_i32, %c0_i32_0 : i32, i32
  }
  func.func @transform_7(%arg0: i32) -> (i32, i32) {
    %c0_i32 = arith.constant 0 : i32
    %c0_i32_0 = arith.constant 0 : i32
    return %arg0, %c0_i32 : i32, i32
  }
}

</mosaic_0001>

<llo_original>
// kernel: tpu_custom_call.1
$region0: #{tpu_custom_call.1}
  #allocation0 [shape = 'u32[]', space=smem, size = 0x4, offset = 0x4, fixed_abs, tag = 'smem constant byte address 0x4 - core index']
  #allocation1 [shape = 'u32[144,128]{1,0:T(1,128)}', space=vmem, size = 0x12000, scoped, tag = 'internal scratch']
  #allocation2 [shape = 'f32[1,1]{1,0:T(1,128)S(6)}', space=smem, size = 0x200, scoped, tag = 'scoped memory for tpu_custom_call.1']
  %s0 = inlined_call_operand.hbm [shape: bf16[128,896], index: 0, kind: input, shape index: {}]
  %s1 = inlined_call_operand.hbm [shape: bf16[896,256], index: 1, kind: input, shape index: {}]
  %s2 = inlined_call_operand.vmem [shape: f32[1,256], index: 2, kind: input, shape index: {}]
  %s3 = inlined_call_operand.hbm [shape: bf16[256,128], index: 3, kind: input, shape index: {}]
  %s4 = inlined_call_operand.vmem [shape: f32[1,128], index: 4, kind: input, shape index: {}]
  %s5 = inlined_call_operand.vmem [shape: f32[1,128], index: 5, kind: input, shape index: {}]
  %s6 = inlined_call_operand.<no memory space> [shape: f32[1,1], index: 6, kind: input, shape index: {}]
  %s7 = inlined_call_operand.hbm [shape: f32[1,128], index: 7, kind: output, shape index: {}]
  %s8 = sld [smem:[#allocation0]]
  $region50: #{tpu_custom_call.1} parent=0
    _
  %s10 = ssub.s32 1, %s8
  %s11 = scalar_select 0, %s10, %s8
  %12 = sst [smem:[#allocation2]] %s6
  $region1: #{tpu_custom_call.1} parent=0
    #allocation3 [shape = 'u8[229376]{0}', space=vmem, size = 0x38000, scoped, tag = 'input window, operand 0, single buffered']
    #allocation4 [shape = 's32[1]{0}', space=sflag, size = 0x4, scoped, tag = 'scoped memory for tpu_custom_call.1']
    #allocation5 [shape = 's32[1]{0}', space=sflag, size = 0x4, scoped, tag = 'scoped memory for tpu_custom_call.1']
    #allocation6 [shape = 'u8[458752]{0}', space=vmem, size = 0x70000, scoped, tag = 'input window, operand 1, single buffered']
    #allocation7 [shape = 's32[1]{0}', space=sflag, size = 0x4, scoped, tag = 'scoped memory for tpu_custom_call.1']
    #allocation8 [shape = 'u8[65536]{0}', space=vmem, size = 0x10000, scoped, tag = 'input window, operand 3, single buffered']
    #allocation9 [shape = 'u8[512]{0}', space=vmem, size = 0x400, scoped, tag = 'output window, operand 0, single buffered']
    %13 = vsyncpa [#allocation4], 0
    %14 = vsyncpa [#allocation7], 0
    %15 = vsyncpa [#allocation5], 0
    // Predicated region
    $region2: #{tpu_custom_call.1} parent=1 // pred_check
      _
    $region3: #{tpu_custom_call.1} parent=1 // pred_check_branch
      %17 = sbr.rel (0) target = $region5
    $region4: #{tpu_custom_call.1} parent=1 // pred_region
      %s19 = ssub.s32 7168, 7168
      %20 = vsyncadd [#allocation4], %s19
      %s21 = sshll.u32 [#allocation3], 4
      %s22 = int_to_ptr.vmem [resolvable:$true] %s21
      %27 = dma.hbm_to_vmem [thread:$0]  %s0, 7168, %s22, [#allocation4], 448, 448, 28
    $region5: #{tpu_custom_call.1} parent=1 // pred_fallthru
      _
    // Predicated region
    $region6: #{tpu_custom_call.1} parent=1 // pred_check
      _
    $region7: #{tpu_custom_call.1} parent=1 // pred_check_branch
      %29 = sbr.rel (0) target = $region9
    $region8: #{tpu_custom_call.1} parent=1 // pred_region
      %s31 = ssub.s32 14336, 14336
      %32 = vsyncadd [#allocation7], %s31
      %s33 = sshll.u32 [#allocation6], 4
      %s34 = int_to_ptr.vmem [resolvable:$true] %s33
      %39 = dma.hbm_to_vmem [thread:$0]  %s1, 14336, %s34, [#allocation7], 128, 128, 8
    $region9: #{tpu_custom_call.1} parent=1 // pred_fallthru
      _
    // Predicated region
    $region10: #{tpu_custom_call.1} parent=1 // pred_check
      _
    $region11: #{tpu_custom_call.1} parent=1 // pred_check_branch
      %41 = sbr.rel (0) target = $region13
    $region12: #{tpu_custom_call.1} parent=1 // pred_region
      _
    $region13: #{tpu_custom_call.1} parent=1 // pred_fallthru
      _
    // Predicated region
    $region14: #{tpu_custom_call.1} parent=1 // pred_check
      _
    $region15: #{tpu_custom_call.1} parent=1 // pred_check_branch
      %43 = sbr.rel (0) target = $region17
    $region16: #{tpu_custom_call.1} parent=1 // pred_region
      %s45 = ssub.s32 2048, 2048
      %46 = vsyncadd [#allocation7], %s45
      %s47 = sshll.u32 [#allocation8], 4
      %s48 = int_to_ptr.vmem [resolvable:$true] %s47
      %53 = dma.hbm_to_vmem [thread:$0]  %s3, 2048, %s48, [#allocation7], 64, 64, 4
    $region17: #{tpu_custom_call.1} parent=1 // pred_fallthru
      _
    // Predicated region
    $region18: #{tpu_custom_call.1} parent=1 // pred_check
      _
    $region19: #{tpu_custom_call.1} parent=1 // pred_check_branch
      %55 = sbr.rel (0) target = $region21
    $region20: #{tpu_custom_call.1} parent=1 // pred_region
      _
    $region21: #{tpu_custom_call.1} parent=1 // pred_fallthru
      _
    // Predicated region
    $region22: #{tpu_custom_call.1} parent=1 // pred_check
      _
    $region23: #{tpu_custom_call.1} parent=1 // pred_check_branch
      %57 = sbr.rel (0) target = $region25
    $region24: #{tpu_custom_call.1} parent=1 // pred_region
      _
    $region25: #{tpu_custom_call.1} parent=1 // pred_fallthru
      _
    // Predicated region
    $region26: #{tpu_custom_call.1} parent=1 // pred_check
      _
    $region27: #{tpu_custom_call.1} parent=1 // pred_check_branch
      %59 = sbr.rel (0) target = $region29
    $region28: #{tpu_custom_call.1} parent=1 // pred_region
      _
    $region29: #{tpu_custom_call.1} parent=1 // pred_fallthru
      _
    // Predicated region
    $region30: #{tpu_custom_call.1} parent=1 // pred_check
      _
    $region31: #{tpu_custom_call.1} parent=1 // pred_check_branch
      %61 = sbr.rel (0) target = $region33
    $region32: #{tpu_custom_call.1} parent=1 // pred_region
      %62 = dma.done [#allocation4], 7168
    $region33: #{tpu_custom_call.1} parent=1 // pred_fallthru
      _
    // Predicated region
    $region34: #{tpu_custom_call.1} parent=1 // pred_check
      _
    $region35: #{tpu_custom_call.1} parent=1 // pred_check_branch
      %64 = sbr.rel (0) target = $region37
    $region36: #{tpu_custom_call.1} parent=1 // pred_region
      %65 = dma.done [#allocation7], 14336
    $region37: #{tpu_custom_call.1} parent=1 // pred_fallthru
      _
    // Predicated region
    $region38: #{tpu_custom_call.1} parent=1 // pred_check
      _
    $region39: #{tpu_custom_call.1} parent=1 // pred_check_branch
      %67 = sbr.rel (0) target = $region41
    $region40: #{tpu_custom_call.1} parent=1 // pred_region
      %68 = dma.done [#allocation7], 2048
    $region41: #{tpu_custom_call.1} parent=1 // pred_fallthru
      _
    %v70 = vld [vmem:[#allocation3] sm:$0xff]
    %v71 = vld [vmem:[#allocation3 + $0x8] sm:$0xff]
    %v72 = vld [vmem:[#allocation3 + $0x10] sm:$0xff]
    %v73 = vld [vmem:[#allocation3 + $0x18] sm:$0xf]
    %v74 = vld [vmem:[#allocation3 + $0x1c] sm:$0xff]
    %v75 = vld [vmem:[#allocation3 + $0x24] sm:$0xff]
    %v76 = vld [vmem:[#allocation3 + $0x2c] sm:$0xff]
    %v77 = vld [vmem:[#allocation3 + $0x34] sm:$0xf]
    %v78 = vld [vmem:[#allocation3 + $0x38] sm:$0xff]
    %v79 = vld [vmem:[#allocation3 + $0x40] sm:$0xff]
    %v80 = vld [vmem:[#allocation3 + $0x48] sm:$0xff]
    %v81 = vld [vmem:[#allocation3 + $0x50] sm:$0xf]
    %v82 = vld [vmem:[#allocation3 + $0x54] sm:$0xff]
    %v83 = vld [vmem:[#allocation3 + $0x5c] sm:$0xff]
    %v84 = vld [vmem:[#allocation3 + $0x64] sm:$0xff]
    %v85 = vld [vmem:[#allocation3 + $0x6c] sm:$0xf]
    %v86 = vld [vmem:[#allocation3 + $0x70] sm:$0xff]
    %v87 = vld [vmem:[#allocation3 + $0x78] sm:$0xff]
    %v88 = vld [vmem:[#allocation3 + $0x80] sm:$0xff]
    %v89 = vld [vmem:[#allocation3 + $0x88] sm:$0xf]
    %v90 = vld [vmem:[#allocation3 + $0x8c] sm:$0xff]
    %v91 = vld [vmem:[#allocation3 + $0x94] sm:$0xff]
    %v92 = vld [vmem:[#allocation3 + $0x9c] sm:$0xff]
    %v93 = vld [vmem:[#allocation3 + $0xa4] sm:$0xf]
    %v94 = vld [vmem:[#allocation3 + $0xa8] sm:$0xff]
    %v95 = vld [vmem:[#allocation3 + $0xb0] sm:$0xff]
    %v96 = vld [vmem:[#allocation3 + $0xb8] sm:$0xff]
    %v97 = vld [vmem:[#allocation3 + $0xc0] sm:$0xf]
    %v98 = vld [vmem:[#allocation3 + $0xc4] sm:$0xff]
    %v99 = vld [vmem:[#allocation3 + $0xcc] sm:$0xff]
    %v100 = vld [vmem:[#allocation3 + $0xd4] sm:$0xff]
    %v101 = vld [vmem:[#allocation3 + $0xdc] sm:$0xf]
    %v102 = vld [vmem:[#allocation3 + $0xe0] sm:$0xff]
    %v103 = vld [vmem:[#allocation3 + $0xe8] sm:$0xff]
    %v104 = vld [vmem:[#allocation3 + $0xf0] sm:$0xff]
    %v105 = vld [vmem:[#allocation3 + $0xf8] sm:$0xf]
    %v106 = vld [vmem:[#allocation3 + $0xfc] sm:$0xff]
    %v107 = vld [vmem:[#allocation3 + $0x104] sm:$0xff]
    %v108 = vld [vmem:[#allocation3 + $0x10c] sm:$0xff]
    %v109 = vld [vmem:[#allocation3 + $0x114] sm:$0xf]
    %v110 = vld [vmem:[#allocation3 + $0x118] sm:$0xff]
    %v111 = vld [vmem:[#allocation3 + $0x120] sm:$0xff]
    %v112 = vld [vmem:[#allocation3 + $0x128] sm:$0xff]
    %v113 = vld [vmem:[#allocation3 + $0x130] sm:$0xf]
    %v114 = vld [vmem:[#allocation3 + $0x134] sm:$0xff]
    %v115 = vld [vmem:[#allocation3 + $0x13c] sm:$0xff]
    %v116 = vld [vmem:[#allocation3 + $0x144] sm:$0xff]
    %v117 = vld [vmem:[#allocation3 + $0x14c] sm:$0xf]
    %v118 = vld [vmem:[#allocation3 + $0x150] sm:$0xff]
    %v119 = vld [vmem:[#allocation3 + $0x158] sm:$0xff]
    %v120 = vld [vmem:[#allocation3 + $0x160] sm:$0xff]
    %v121 = vld [vmem:[#allocation3 + $0x168] sm:$0xf]
    %v122 = vld [vmem:[#allocation3 + $0x16c] sm:$0xff]
    %v123 = vld [vmem:[#allocation3 + $0x174] sm:$0xff]
    %v124 = vld [vmem:[#allocation3 + $0x17c] sm:$0xff]
    %v125 = vld [vmem:[#allocation3 + $0x184] sm:$0xf]
    %v126 = vld [vmem:[#allocation3 + $0x188] sm:$0xff]
    %v127 = vld [vmem:[#allocation3 + $0x190] sm:$0xff]
    %v128 = vld [vmem:[#allocation3 + $0x198] sm:$0xff]
    %v129 = vld [vmem:[#allocation3 + $0x1a0] sm:$0xf]
    %v130 = vld [vmem:[#allocation3 + $0x1a4] sm:$0xff]
    %v131 = vld [vmem:[#allocation3 + $0x1ac] sm:$0xff]
    %v132 = vld [vmem:[#allocation3 + $0x1b4] sm:$0xff]
    %v133 = vld [vmem:[#allocation3 + $0x1bc] sm:$0xf]
    %v134 = vld [vmem:[#allocation6] sm:$0xff]
    %v135 = vld [vmem:[#allocation6 + $0x8] sm:$0xff]
    %v136 = vld [vmem:[#allocation6 + $0x10] sm:$0xff]
    %v137 = vld [vmem:[#allocation6 + $0x18] sm:$0xff]
    %v138 = vld [vmem:[#allocation6 + $0x20] sm:$0xff]
    %v139 = vld [vmem:[#allocation6 + $0x28] sm:$0xff]
    %v140 = vld [vmem:[#allocation6 + $0x30] sm:$0xff]
    %v141 = vld [vmem:[#allocation6 + $0x38] sm:$0xff]
    %v142 = vld [vmem:[#allocation6 + $0x40] sm:$0xff]
    %v143 = vld [vmem:[#allocation6 + $0x48] sm:$0xff]
    %v144 = vld [vmem:[#allocation6 + $0x50] sm:$0xff]
    %v145 = vld [vmem:[#allocation6 + $0x58] sm:$0xff]
    %v146 = vld [vmem:[#allocation6 + $0x60] sm:$0xff]
    %v147 = vld [vmem:[#allocation6 + $0x68] sm:$0xff]
    %v148 = vld [vmem:[#allocation6 + $0x70] sm:$0xff]
    %v149 = vld [vmem:[#allocation6 + $0x78] sm:$0xff]
    %v150 = vld [vmem:[#allocation6 + $0x80] sm:$0xff]
    %v151 = vld [vmem:[#allocation6 + $0x88] sm:$0xff]
    %v152 = vld [vmem:[#allocation6 + $0x90] sm:$0xff]
    %v153 = vld [vmem:[#allocation6 + $0x98] sm:$0xff]
    %v154 = vld [vmem:[#allocation6 + $0xa0] sm:$0xff]
    %v155 = vld [vmem:[#allocation6 + $0xa8] sm:$0xff]
    %v156 = vld [vmem:[#allocation6 + $0xb0] sm:$0xff]
    %v157 = vld [vmem:[#allocation6 + $0xb8] sm:$0xff]
    %v158 = vld [vmem:[#allocation6 + $0xc0] sm:$0xff]
    %v159 = vld [vmem:[#allocation6 + $0xc8] sm:$0xff]
    %v160 = vld [vmem:[#allocation6 + $0xd0] sm:$0xff]
    %v161 = vld [vmem:[#allocation6 + $0xd8] sm:$0xff]
    %v162 = vld [vmem:[#allocation6 + $0xe0] sm:$0xff]
    %v163 = vld [vmem:[#allocation6 + $0xe8] sm:$0xff]
    %v164 = vld [vmem:[#allocation6 + $0xf0] sm:$0xff]
    %v165 = vld [vmem:[#allocation6 + $0xf8] sm:$0xff]
    %v166 = vld [vmem:[#allocation6 + $0x100] sm:$0xff]
    %v167 = vld [vmem:[#allocation6 + $0x108] sm:$0xff]
    %v168 = vld [vmem:[#allocation6 + $0x110] sm:$0xff]
    %v169 = vld [vmem:[#allocation6 + $0x118] sm:$0xff]
    %v170 = vld [vmem:[#allocation6 + $0x120] sm:$0xff]
    %v171 = vld [vmem:[#allocation6 + $0x128] sm:$0xff]
    %v172 = vld [vmem:[#allocation6 + $0x130] sm:$0xff]
    %v173 = vld [vmem:[#allocation6 + $0x138] sm:$0xff]
    %v174 = vld [vmem:[#allocation6 + $0x140] sm:$0xff]
    %v175 = vld [vmem:[#allocation6 + $0x148] sm:$0xff]
    %v176 = vld [vmem:[#allocation6 + $0x150] sm:$0xff]
    %v177 = vld [vmem:[#allocation6 + $0x158] sm:$0xff]
    %v178 = vld [vmem:[#allocation6 + $0x160] sm:$0xff]
    %v179 = vld [vmem:[#allocation6 + $0x168] sm:$0xff]
    %v180 = vld [vmem:[#allocation6 + $0x170] sm:$0xff]
    %v181 = vld [vmem:[#allocation6 + $0x178] sm:$0xff]
    %v182 = vld [vmem:[#allocation6 + $0x180] sm:$0xff]
    %v183 = vld [vmem:[#allocation6 + $0x188] sm:$0xff]
    %v184 = vld [vmem:[#allocation6 + $0x190] sm:$0xff]
    %v185 = vld [vmem:[#allocation6 + $0x198] sm:$0xff]
    %v186 = vld [vmem:[#allocation6 + $0x1a0] sm:$0xff]
    %v187 = vld [vmem:[#allocation6 + $0x1a8] sm:$0xff]
    %v188 = vld [vmem:[#allocation6 + $0x1b0] sm:$0xff]
    %v189 = vld [vmem:[#allocation6 + $0x1b8] sm:$0xff]
    %v190 = vld [vmem:[#allocation6 + $0x1c0] sm:$0xff]
    %v191 = vld [vmem:[#allocation6 + $0x1c8] sm:$0xff]
    %v192 = vld [vmem:[#allocation6 + $0x1d0] sm:$0xff]
    %v193 = vld [vmem:[#allocation6 + $0x1d8] sm:$0xff]
    %v194 = vld [vmem:[#allocation6 + $0x1e0] sm:$0xff]
    %v195 = vld [vmem:[#allocation6 + $0x1e8] sm:$0xff]
    %v196 = vld [vmem:[#allocation6 + $0x1f0] sm:$0xff]
    %v197 = vld [vmem:[#allocation6 + $0x1f8] sm:$0xff]
    %v198 = vld [vmem:[#allocation6 + $0x200] sm:$0xff]
    %v199 = vld [vmem:[#allocation6 + $0x208] sm:$0xff]
    %v200 = vld [vmem:[#allocation6 + $0x210] sm:$0xff]
    %v201 = vld [vmem:[#allocation6 + $0x218] sm:$0xff]
    %v202 = vld [vmem:[#allocation6 + $0x220] sm:$0xff]
    %v203 = vld [vmem:[#allocation6 + $0x228] sm:$0xff]
    %v204 = vld [vmem:[#allocation6 + $0x230] sm:$0xff]
    %v205 = vld [vmem:[#allocation6 + $0x238] sm:$0xff]
    %v206 = vld [vmem:[#allocation6 + $0x240] sm:$0xff]
    %v207 = vld [vmem:[#allocation6 + $0x248] sm:$0xff]
    %v208 = vld [vmem:[#allocation6 + $0x250] sm:$0xff]
    %v209 = vld [vmem:[#allocation6 + $0x258] sm:$0xff]
    %v210 = vld [vmem:[#allocation6 + $0x260] sm:$0xff]
    %v211 = vld [vmem:[#allocation6 + $0x268] sm:$0xff]
    %v212 = vld [vmem:[#allocation6 + $0x270] sm:$0xff]
    %v213 = vld [vmem:[#allocation6 + $0x278] sm:$0xff]
    %v214 = vld [vmem:[#allocation6 + $0x280] sm:$0xff]
    %v215 = vld [vmem:[#allocation6 + $0x288] sm:$0xff]
    %v216 = vld [vmem:[#allocation6 + $0x290] sm:$0xff]
    %v217 = vld [vmem:[#allocation6 + $0x298] sm:$0xff]
    %v218 = vld [vmem:[#allocation6 + $0x2a0] sm:$0xff]
    %v219 = vld [vmem:[#allocation6 + $0x2a8] sm:$0xff]
    %v220 = vld [vmem:[#allocation6 + $0x2b0] sm:$0xff]
    %v221 = vld [vmem:[#allocation6 + $0x2b8] sm:$0xff]
    %v222 = vld [vmem:[#allocation6 + $0x2c0] sm:$0xff]
    %v223 = vld [vmem:[#allocation6 + $0x2c8] sm:$0xff]
    %v224 = vld [vmem:[#allocation6 + $0x2d0] sm:$0xff]
    %v225 = vld [vmem:[#allocation6 + $0x2d8] sm:$0xff]
    %v226 = vld [vmem:[#allocation6 + $0x2e0] sm:$0xff]
    %v227 = vld [vmem:[#allocation6 + $0x2e8] sm:$0xff]
    %v228 = vld [vmem:[#allocation6 + $0x2f0] sm:$0xff]
    %v229 = vld [vmem:[#allocation6 + $0x2f8] sm:$0xff]
    %v230 = vld [vmem:[#allocation6 + $0x300] sm:$0xff]
    %v231 = vld [vmem:[#allocation6 + $0x308] sm:$0xff]
    %v232 = vld [vmem:[#allocation6 + $0x310] sm:$0xff]
    %v233 = vld [vmem:[#allocation6 + $0x318] sm:$0xff]
    %v234 = vld [vmem:[#allocation6 + $0x320] sm:$0xff]
    %v235 = vld [vmem:[#allocation6 + $0x328] sm:$0xff]
    %v236 = vld [vmem:[#allocation6 + $0x330] sm:$0xff]
    %v237 = vld [vmem:[#allocation6 + $0x338] sm:$0xff]
    %v238 = vld [vmem:[#allocation6 + $0x340] sm:$0xff]
    %v239 = vld [vmem:[#allocation6 + $0x348] sm:$0xff]
    %v240 = vld [vmem:[#allocation6 + $0x350] sm:$0xff]
    %v241 = vld [vmem:[#allocation6 + $0x358] sm:$0xff]
    %v242 = vld [vmem:[#allocation6 + $0x360] sm:$0xff]
    %v243 = vld [vmem:[#allocation6 + $0x368] sm:$0xff]
    %v244 = vld [vmem:[#allocation6 + $0x370] sm:$0xff]
    %v245 = vld [vmem:[#allocation6 + $0x378] sm:$0xff]
    %v246 = vld [vmem:[%s2] sm:$0x3]
    %v248 = vlaneseq
    %v249 = vshrl.u32 %v248, 7
    %v250 = vsub.s32 0, %v249
    %v251 = vrot.slane %v246, %v250
    %v252 = vlaneseq
    %v253 = vshrl.u32 %v252, 7
    %v254 = vsub.s32 1, %v253
    %v255 = vrot.slane %v246, %v254
    %v322 = vunpack.c.l.b16 %v70
    %v323 = vunpack.c.h.b16 %v70
    %v324 = vunpack.c.l.b16 %v71
    %v325 = vunpack.c.h.b16 %v71
    %v326 = vunpack.c.l.b16 %v72
    %v327 = vunpack.c.h.b16 %v72
    %v328 = vunpack.c.l.b16 %v73
    %v329 = vunpack.c.l.b16 %v74
    %v330 = vunpack.c.h.b16 %v74
    %v331 = vunpack.c.l.b16 %v75
    %v332 = vunpack.c.h.b16 %v75
    %v333 = vunpack.c.l.b16 %v76
    %v334 = vunpack.c.h.b16 %v76
    %v335 = vunpack.c.l.b16 %v77
    %v336 = vunpack.c.l.b16 %v78
    %v337 = vunpack.c.h.b16 %v78
    %v338 = vunpack.c.l.b16 %v79
    %v339 = vunpack.c.h.b16 %v79
    %v340 = vunpack.c.l.b16 %v80
    %v341 = vunpack.c.h.b16 %v80
    %v342 = vunpack.c.l.b16 %v81
    %v343 = vunpack.c.l.b16 %v82
    %v344 = vunpack.c.h.b16 %v82
    %v345 = vunpack.c.l.b16 %v83
    %v346 = vunpack.c.h.b16 %v83
    %v347 = vunpack.c.l.b16 %v84
    %v348 = vunpack.c.h.b16 %v84
    %v349 = vunpack.c.l.b16 %v85
    %v350 = vunpack.c.l.b16 %v86
    %v351 = vunpack.c.h.b16 %v86
    %v352 = vunpack.c.l.b16 %v87
    %v353 = vunpack.c.h.b16 %v87
    %v354 = vunpack.c.l.b16 %v88
    %v355 = vunpack.c.h.b16 %v88
    %v356 = vunpack.c.l.b16 %v89
    %v357 = vunpack.c.l.b16 %v90
    %v358 = vunpack.c.h.b16 %v90
    %v359 = vunpack.c.l.b16 %v91
    %v360 = vunpack.c.h.b16 %v91
    %v361 = vunpack.c.l.b16 %v92
    %v362 = vunpack.c.h.b16 %v92
    %v363 = vunpack.c.l.b16 %v93
    %v364 = vunpack.c.l.b16 %v94
    %v365 = vunpack.c.h.b16 %v94
    %v366 = vunpack.c.l.b16 %v95
    %v367 = vunpack.c.h.b16 %v95
    %v368 = vunpack.c.l.b16 %v96
    %v369 = vunpack.c.h.b16 %v96
    %v370 = vunpack.c.l.b16 %v97
    %v371 = vunpack.c.l.b16 %v98
    %v372 = vunpack.c.h.b16 %v98
    %v373 = vunpack.c.l.b16 %v99
    %v374 = vunpack.c.h.b16 %v99
    %v375 = vunpack.c.l.b16 %v100
    %v376 = vunpack.c.h.b16 %v100
    %v377 = vunpack.c.l.b16 %v101
    %v378 = vunpack.c.l.b16 %v102
    %v379 = vunpack.c.h.b16 %v102
    %v380 = vunpack.c.l.b16 %v103
    %v381 = vunpack.c.h.b16 %v103
    %v382 = vunpack.c.l.b16 %v104
    %v383 = vunpack.c.h.b16 %v104
    %v384 = vunpack.c.l.b16 %v105
    %v385 = vunpack.c.l.b16 %v106
    %v386 = vunpack.c.h.b16 %v106
    %v387 = vunpack.c.l.b16 %v107
    %v388 = vunpack.c.h.b16 %v107
    %v389 = vunpack.c.l.b16 %v108
    %v390 = vunpack.c.h.b16 %v108
    %v391 = vunpack.c.l.b16 %v109
    %v392 = vunpack.c.l.b16 %v110
    %v393 = vunpack.c.h.b16 %v110
    %v394 = vunpack.c.l.b16 %v111
    %v395 = vunpack.c.h.b16 %v111
    %v396 = vunpack.c.l.b16 %v112
    %v397 = vunpack.c.h.b16 %v112
    %v398 = vunpack.c.l.b16 %v113
    %v399 = vunpack.c.l.b16 %v114
    %v400 = vunpack.c.h.b16 %v114
    %v401 = vunpack.c.l.b16 %v115
    %v402 = vunpack.c.h.b16 %v115
    %v403 = vunpack.c.l.b16 %v116
    %v404 = vunpack.c.h.b16 %v116
    %v405 = vunpack.c.l.b16 %v117
    %v406 = vunpack.c.l.b16 %v118
    %v407 = vunpack.c.h.b16 %v118
    %v408 = vunpack.c.l.b16 %v119
    %v409 = vunpack.c.h.b16 %v119
    %v410 = vunpack.c.l.b16 %v120
    %v411 = vunpack.c.h.b16 %v120
    %v412 = vunpack.c.l.b16 %v121
    %v413 = vunpack.c.l.b16 %v122
    %v414 = vunpack.c.h.b16 %v122
    %v415 = vunpack.c.l.b16 %v123
    %v416 = vunpack.c.h.b16 %v123
    %v417 = vunpack.c.l.b16 %v124
    %v418 = vunpack.c.h.b16 %v124
    %v419 = vunpack.c.l.b16 %v125
    %v420 = vunpack.c.l.b16 %v126
    %v421 = vunpack.c.h.b16 %v126
    %v422 = vunpack.c.l.b16 %v127
    %v423 = vunpack.c.h.b16 %v127
    %v424 = vunpack.c.l.b16 %v128
    %v425 = vunpack.c.h.b16 %v128
    %v426 = vunpack.c.l.b16 %v129
    %v427 = vunpack.c.l.b16 %v130
    %v428 = vunpack.c.h.b16 %v130
    %v429 = vunpack.c.l.b16 %v131
    %v430 = vunpack.c.h.b16 %v131
    %v431 = vunpack.c.l.b16 %v132
    %v432 = vunpack.c.h.b16 %v132
    %v433 = vunpack.c.l.b16 %v133
    %v434 = vpack.c.b16 %v329, %v322
    %v435 = vpack.c.b16 %v330, %v323
    %v436 = vpack.c.b16 %v331, %v324
    %v437 = vpack.c.b16 %v332, %v325
    %v438 = vpack.c.b16 %v333, %v326
    %v439 = vpack.c.b16 %v334, %v327
    %v440 = vpack.c.b16 %v335, %v328
    %v441 = vpack.c.b16 %v343, %v336
    %v442 = vpack.c.b16 %v344, %v337
    %v443 = vpack.c.b16 %v345, %v338
    %v444 = vpack.c.b16 %v346, %v339
    %v445 = vpack.c.b16 %v347, %v340
    %v446 = vpack.c.b16 %v348, %v341
    %v447 = vpack.c.b16 %v349, %v342
    %v448 = vpack.c.b16 %v357, %v350
    %v449 = vpack.c.b16 %v358, %v351
    %v450 = vpack.c.b16 %v359, %v352
    %v451 = vpack.c.b16 %v360, %v353
    %v452 = vpack.c.b16 %v361, %v354
    %v453 = vpack.c.b16 %v362, %v355
    %v454 = vpack.c.b16 %v363, %v356
    %v455 = vpack.c.b16 %v371, %v364
    %v456 = vpack.c.b16 %v372, %v365
    %v457 = vpack.c.b16 %v373, %v366
    %v458 = vpack.c.b16 %v374, %v367
    %v459 = vpack.c.b16 %v375, %v368
    %v460 = vpack.c.b16 %v376, %v369
    %v461 = vpack.c.b16 %v377, %v370
    %v462 = vpack.c.b16 %v385, %v378
    %v463 = vpack.c.b16 %v386, %v379
    %v464 = vpack.c.b16 %v387, %v380
    %v465 = vpack.c.b16 %v388, %v381
    %v466 = vpack.c.b16 %v389, %v382
    %v467 = vpack.c.b16 %v390, %v383
    %v468 = vpack.c.b16 %v391, %v384
    %v469 = vpack.c.b16 %v399, %v392
    %v470 = vpack.c.b16 %v400, %v393
    %v471 = vpack.c.b16 %v401, %v394
    %v472 = vpack.c.b16 %v402, %v395
    %v473 = vpack.c.b16 %v403, %v396
    %v474 = vpack.c.b16 %v404, %v397
    %v475 = vpack.c.b16 %v405, %v398
    %v476 = vpack.c.b16 %v413, %v406
    %v477 = vpack.c.b16 %v414, %v407
    %v478 = vpack.c.b16 %v415, %v408
    %v479 = vpack.c.b16 %v416, %v409
    %v480 = vpack.c.b16 %v417, %v410
    %v481 = vpack.c.b16 %v418, %v411
    %v482 = vpack.c.b16 %v419, %v412
    %v483 = vpack.c.b16 %v427, %v420
    %v484 = vpack.c.b16 %v428, %v421
    %v485 = vpack.c.b16 %v429, %v422
    %v486 = vpack.c.b16 %v430, %v423
    %v487 = vpack.c.b16 %v431, %v424
    %v488 = vpack.c.b16 %v432, %v425
    %v489 = vpack.c.b16 %v433, %v426
    %v658 = vunpack.c.l.b16 %v134
    %v659 = vunpack.c.h.b16 %v134
    %v660 = vunpack.c.l.b16 %v135
    %v661 = vunpack.c.h.b16 %v135
    %v662 = vunpack.c.l.b16 %v136
    %v663 = vunpack.c.h.b16 %v136
    %v664 = vunpack.c.l.b16 %v137
    %v665 = vunpack.c.h.b16 %v137
    %v666 = vunpack.c.l.b16 %v138
    %v667 = vunpack.c.h.b16 %v138
    %v668 = vunpack.c.l.b16 %v139
    %v669 = vunpack.c.h.b16 %v139
    %v670 = vunpack.c.l.b16 %v140
    %v671 = vunpack.c.h.b16 %v140
    %v672 = vunpack.c.l.b16 %v141
    %v673 = vunpack.c.h.b16 %v141
    %v674 = vunpack.c.l.b16 %v142
    %v675 = vunpack.c.h.b16 %v142
    %v676 = vunpack.c.l.b16 %v143
    %v677 = vunpack.c.h.b16 %v143
    %v678 = vunpack.c.l.b16 %v144
    %v679 = vunpack.c.h.b16 %v144
    %v680 = vunpack.c.l.b16 %v145
    %v681 = vunpack.c.h.b16 %v145
    %v682 = vunpack.c.l.b16 %v146
    %v683 = vunpack.c.h.b16 %v146
    %v684 = vunpack.c.l.b16 %v147
    %v685 = vunpack.c.h.b16 %v147
    %v686 = vunpack.c.l.b16 %v148
    %v687 = vunpack.c.h.b16 %v148
    %v688 = vunpack.c.l.b16 %v149
    %v689 = vunpack.c.h.b16 %v149
    %v690 = vunpack.c.l.b16 %v150
    %v691 = vunpack.c.h.b16 %v150
    %v692 = vunpack.c.l.b16 %v151
    %v693 = vunpack.c.h.b16 %v151
    %v694 = vunpack.c.l.b16 %v152
    %v695 = vunpack.c.h.b16 %v152
    %v696 = vunpack.c.l.b16 %v153
    %v697 = vunpack.c.h.b16 %v153
    %v698 = vunpack.c.l.b16 %v154
    %v699 = vunpack.c.h.b16 %v154
    %v700 = vunpack.c.l.b16 %v155
    %v701 = vunpack.c.h.b16 %v155
    %v702 = vunpack.c.l.b16 %v156
    %v703 = vunpack.c.h.b16 %v156
    %v704 = vunpack.c.l.b16 %v157
    %v705 = vunpack.c.h.b16 %v157
    %v706 = vunpack.c.l.b16 %v158
    %v707 = vunpack.c.h.b16 %v158
    %v708 = vunpack.c.l.b16 %v159
    %v709 = vunpack.c.h.b16 %v159
    %v710 = vunpack.c.l.b16 %v160
    %v711 = vunpack.c.h.b16 %v160
    %v712 = vunpack.c.l.b16 %v161
    %v713 = vunpack.c.h.b16 %v161
    %v714 = vunpack.c.l.b16 %v162
    %v715 = vunpack.c.h.b16 %v162
    %v716 = vunpack.c.l.b16 %v163
    %v717 = vunpack.c.h.b16 %v163
    %v718 = vunpack.c.l.b16 %v164
    %v719 = vunpack.c.h.b16 %v164
    %v720 = vunpack.c.l.b16 %v165
    %v721 = vunpack.c.h.b16 %v165
    %v722 = vunpack.c.l.b16 %v166
    %v723 = vunpack.c.h.b16 %v166
    %v724 = vunpack.c.l.b16 %v167
    %v725 = vunpack.c.h.b16 %v167
    %v726 = vunpack.c.l.b16 %v168
    %v727 = vunpack.c.h.b16 %v168
    %v728 = vunpack.c.l.b16 %v169
    %v729 = vunpack.c.h.b16 %v169
    %v730 = vunpack.c.l.b16 %v170
    %v731 = vunpack.c.h.b16 %v170
    %v732 = vunpack.c.l.b16 %v171
    %v733 = vunpack.c.h.b16 %v171
    %v734 = vunpack.c.l.b16 %v172
    %v735 = vunpack.c.h.b16 %v172
    %v736 = vunpack.c.l.b16 %v173
    %v737 = vunpack.c.h.b16 %v173
    %v738 = vunpack.c.l.b16 %v174
    %v739 = vunpack.c.h.b16 %v174
    %v740 = vunpack.c.l.b16 %v175
    %v741 = vunpack.c.h.b16 %v175
    %v742 = vunpack.c.l.b16 %v176
    %v743 = vunpack.c.h.b16 %v176
    %v744 = vunpack.c.l.b16 %v177
    %v745 = vunpack.c.h.b16 %v177
    %v746 = vunpack.c.l.b16 %v178
    %v747 = vunpack.c.h.b16 %v178
    %v748 = vunpack.c.l.b16 %v179
    %v749 = vunpack.c.h.b16 %v179
    %v750 = vunpack.c.l.b16 %v180
    %v751 = vunpack.c.h.b16 %v180
    %v752 = vunpack.c.l.b16 %v181
    %v753 = vunpack.c.h.b16 %v181
    %v754 = vunpack.c.l.b16 %v182
    %v755 = vunpack.c.h.b16 %v182
    %v756 = vunpack.c.l.b16 %v183
    %v757 = vunpack.c.h.b16 %v183
    %v758 = vunpack.c.l.b16 %v184
    %v759 = vunpack.c.h.b16 %v184
    %v760 = vunpack.c.l.b16 %v185
    %v761 = vunpack.c.h.b16 %v185
    %v762 = vunpack.c.l.b16 %v186
    %v763 = vunpack.c.h.b16 %v186
    %v764 = vunpack.c.l.b16 %v187
    %v765 = vunpack.c.h.b16 %v187
    %v766 = vunpack.c.l.b16 %v188
    %v767 = vunpack.c.h.b16 %v188
    %v768 = vunpack.c.l.b16 %v189
    %v769 = vunpack.c.h.b16 %v189
    %v770 = vunpack.c.l.b16 %v190
    %v771 = vunpack.c.h.b16 %v190
    %v772 = vunpack.c.l.b16 %v191
    %v773 = vunpack.c.h.b16 %v191
    %v774 = vunpack.c.l.b16 %v192
    %v775 = vunpack.c.h.b16 %v192
    %v776 = vunpack.c.l.b16 %v193
    %v777 = vunpack.c.h.b16 %v193
    %v778 = vunpack.c.l.b16 %v194
    %v779 = vunpack.c.h.b16 %v194
    %v780 = vunpack.c.l.b16 %v195
    %v781 = vunpack.c.h.b16 %v195
    %v782 = vunpack.c.l.b16 %v196
    %v783 = vunpack.c.h.b16 %v196
    %v784 = vunpack.c.l.b16 %v197
    %v785 = vunpack.c.h.b16 %v197
    %v786 = vunpack.c.l.b16 %v198
    %v787 = vunpack.c.h.b16 %v198
    %v788 = vunpack.c.l.b16 %v199
    %v789 = vunpack.c.h.b16 %v199
    %v790 = vunpack.c.l.b16 %v200
    %v791 = vunpack.c.h.b16 %v200
    %v792 = vunpack.c.l.b16 %v201
    %v793 = vunpack.c.h.b16 %v201
    %v794 = vunpack.c.l.b16 %v202
    %v795 = vunpack.c.h.b16 %v202
    %v796 = vunpack.c.l.b16 %v203
    %v797 = vunpack.c.h.b16 %v203
    %v798 = vunpack.c.l.b16 %v204
    %v799 = vunpack.c.h.b16 %v204
    %v800 = vunpack.c.l.b16 %v205
    %v801 = vunpack.c.h.b16 %v205
    %v802 = vunpack.c.l.b16 %v206
    %v803 = vunpack.c.h.b16 %v206
    %v804 = vunpack.c.l.b16 %v207
    %v805 = vunpack.c.h.b16 %v207
    %v806 = vunpack.c.l.b16 %v208
    %v807 = vunpack.c.h.b16 %v208
    %v808 = vunpack.c.l.b16 %v209
    %v809 = vunpack.c.h.b16 %v209
    %v810 = vunpack.c.l.b16 %v210
    %v811 = vunpack.c.h.b16 %v210
    %v812 = vunpack.c.l.b16 %v211
    %v813 = vunpack.c.h.b16 %v211
    %v814 = vunpack.c.l.b16 %v212
    %v815 = vunpack.c.h.b16 %v212
    %v816 = vunpack.c.l.b16 %v213
    %v817 = vunpack.c.h.b16 %v213
    %v818 = vunpack.c.l.b16 %v214
    %v819 = vunpack.c.h.b16 %v214
    %v820 = vunpack.c.l.b16 %v215
    %v821 = vunpack.c.h.b16 %v215
    %v822 = vunpack.c.l.b16 %v216
    %v823 = vunpack.c.h.b16 %v216
    %v824 = vunpack.c.l.b16 %v217
    %v825 = vunpack.c.h.b16 %v217
    %v826 = vunpack.c.l.b16 %v218
    %v827 = vunpack.c.h.b16 %v218
    %v828 = vunpack.c.l.b16 %v219
    %v829 = vunpack.c.h.b16 %v219
    %v830 = vunpack.c.l.b16 %v220
    %v831 = vunpack.c.h.b16 %v220
    %v832 = vunpack.c.l.b16 %v221
    %v833 = vunpack.c.h.b16 %v221
    %v834 = vunpack.c.l.b16 %v222
    %v835 = vunpack.c.h.b16 %v222
    %v836 = vunpack.c.l.b16 %v223
    %v837 = vunpack.c.h.b16 %v223
    %v838 = vunpack.c.l.b16 %v224
    %v839 = vunpack.c.h.b16 %v224
    %v840 = vunpack.c.l.b16 %v225
    %v841 = vunpack.c.h.b16 %v225
    %v842 = vunpack.c.l.b16 %v226
    %v843 = vunpack.c.h.b16 %v226
    %v844 = vunpack.c.l.b16 %v227
    %v845 = vunpack.c.h.b16 %v227
    %v846 = vunpack.c.l.b16 %v228
    %v847 = vunpack.c.h.b16 %v228
    %v848 = vunpack.c.l.b16 %v229
    %v849 = vunpack.c.h.b16 %v229
    %v850 = vunpack.c.l.b16 %v230
    %v851 = vunpack.c.h.b16 %v230
    %v852 = vunpack.c.l.b16 %v231
    %v853 = vunpack.c.h.b16 %v231
    %v854 = vunpack.c.l.b16 %v232
    %v855 = vunpack.c.h.b16 %v232
    %v856 = vunpack.c.l.b16 %v233
    %v857 = vunpack.c.h.b16 %v233
    %v858 = vunpack.c.l.b16 %v234
    %v859 = vunpack.c.h.b16 %v234
    %v860 = vunpack.c.l.b16 %v235
    %v861 = vunpack.c.h.b16 %v235
    %v862 = vunpack.c.l.b16 %v236
    %v863 = vunpack.c.h.b16 %v236
    %v864 = vunpack.c.l.b16 %v237
    %v865 = vunpack.c.h.b16 %v237
    %v866 = vunpack.c.l.b16 %v238
    %v867 = vunpack.c.h.b16 %v238
    %v868 = vunpack.c.l.b16 %v239
    %v869 = vunpack.c.h.b16 %v239
    %v870 = vunpack.c.l.b16 %v240
    %v871 = vunpack.c.h.b16 %v240
    %v872 = vunpack.c.l.b16 %v241
    %v873 = vunpack.c.h.b16 %v241
    %v874 = vunpack.c.l.b16 %v242
    %v875 = vunpack.c.h.b16 %v242
    %v876 = vunpack.c.l.b16 %v243
    %v877 = vunpack.c.h.b16 %v243
    %v878 = vunpack.c.l.b16 %v244
    %v879 = vunpack.c.h.b16 %v244
    %v880 = vunpack.c.l.b16 %v245
    %v881 = vunpack.c.h.b16 %v245
    %v882 = vpack.c.b16 %v660, %v658
    %v883 = vpack.c.b16 %v661, %v659
    %v884 = vpack.c.b16 %v664, %v662
    %v885 = vpack.c.b16 %v665, %v663
    %v886 = vpack.c.b16 %v668, %v666
    %v887 = vpack.c.b16 %v669, %v667
    %v888 = vpack.c.b16 %v672, %v670
    %v889 = vpack.c.b16 %v673, %v671
    %v890 = vpack.c.b16 %v676, %v674
    %v891 = vpack.c.b16 %v677, %v675
    %v892 = vpack.c.b16 %v680, %v678
    %v893 = vpack.c.b16 %v681, %v679
    %v894 = vpack.c.b16 %v684, %v682
    %v895 = vpack.c.b16 %v685, %v683
    %v896 = vpack.c.b16 %v688, %v686
    %v897 = vpack.c.b16 %v689, %v687
    %v898 = vpack.c.b16 %v692, %v690
    %v899 = vpack.c.b16 %v693, %v691
    %v900 = vpack.c.b16 %v696, %v694
    %v901 = vpack.c.b16 %v697, %v695
    %v902 = vpack.c.b16 %v700, %v698
    %v903 = vpack.c.b16 %v701, %v699
    %v904 = vpack.c.b16 %v704, %v702
    %v905 = vpack.c.b16 %v705, %v703
    %v906 = vpack.c.b16 %v708, %v706
    %v907 = vpack.c.b16 %v709, %v707
    %v908 = vpack.c.b16 %v712, %v710
    %v909 = vpack.c.b16 %v713, %v711
    %v910 = vpack.c.b16 %v716, %v714
    %v911 = vpack.c.b16 %v717, %v715
    %v912 = vpack.c.b16 %v720, %v718
    %v913 = vpack.c.b16 %v721, %v719
    %v914 = vpack.c.b16 %v724, %v722
    %v915 = vpack.c.b16 %v725, %v723
    %v916 = vpack.c.b16 %v728, %v726
    %v917 = vpack.c.b16 %v729, %v727
    %v918 = vpack.c.b16 %v732, %v730
    %v919 = vpack.c.b16 %v733, %v731
    %v920 = vpack.c.b16 %v736, %v734
    %v921 = vpack.c.b16 %v737, %v735
    %v922 = vpack.c.b16 %v740, %v738
    %v923 = vpack.c.b16 %v741, %v739
    %v924 = vpack.c.b16 %v744, %v742
    %v925 = vpack.c.b16 %v745, %v743
    %v926 = vpack.c.b16 %v748, %v746
    %v927 = vpack.c.b16 %v749, %v747
    %v928 = vpack.c.b16 %v752, %v750
    %v929 = vpack.c.b16 %v753, %v751
    %v930 = vpack.c.b16 %v756, %v754
    %v931 = vpack.c.b16 %v757, %v755
    %v932 = vpack.c.b16 %v760, %v758
    %v933 = vpack.c.b16 %v761, %v759
    %v934 = vpack.c.b16 %v764, %v762
    %v935 = vpack.c.b16 %v765, %v763
    %v936 = vpack.c.b16 %v768, %v766
    %v937 = vpack.c.b16 %v769, %v767
    %v938 = vpack.c.b16 %v772, %v770
    %v939 = vpack.c.b16 %v773, %v771
    %v940 = vpack.c.b16 %v776, %v774
    %v941 = vpack.c.b16 %v777, %v775
    %v942 = vpack.c.b16 %v780, %v778
    %v943 = vpack.c.b16 %v781, %v779
    %v944 = vpack.c.b16 %v784, %v782
    %v945 = vpack.c.b16 %v785, %v783
    %v946 = vpack.c.b16 %v788, %v786
    %v947 = vpack.c.b16 %v789, %v787
    %v948 = vpack.c.b16 %v792, %v790
    %v949 = vpack.c.b16 %v793, %v791
    %v950 = vpack.c.b16 %v796, %v794
    %v951 = vpack.c.b16 %v797, %v795
    %v952 = vpack.c.b16 %v800, %v798
    %v953 = vpack.c.b16 %v801, %v799
    %v954 = vpack.c.b16 %v804, %v802
    %v955 = vpack.c.b16 %v805, %v803
    %v956 = vpack.c.b16 %v808, %v806
    %v957 = vpack.c.b16 %v809, %v807
    %v958 = vpack.c.b16 %v812, %v810
    %v959 = vpack.c.b16 %v813, %v811
    %v960 = vpack.c.b16 %v816, %v814
    %v961 = vpack.c.b16 %v817, %v815
    %v962 = vpack.c.b16 %v820, %v818
    %v963 = vpack.c.b16 %v821, %v819
    %v964 = vpack.c.b16 %v824, %v822
    %v965 = vpack.c.b16 %v825, %v823
    %v966 = vpack.c.b16 %v828, %v826
    %v967 = vpack.c.b16 %v829, %v827
    %v968 = vpack.c.b16 %v832, %v830
    %v969 = vpack.c.b16 %v833, %v831
    %v970 = vpack.c.b16 %v836, %v834
    %v971 = vpack.c.b16 %v837, %v835
    %v972 = vpack.c.b16 %v840, %v838
    %v973 = vpack.c.b16 %v841, %v839
    %v974 = vpack.c.b16 %v844, %v842
    %v975 = vpack.c.b16 %v845, %v843
    %v976 = vpack.c.b16 %v848, %v846
    %v977 = vpack.c.b16 %v849, %v847
    %v978 = vpack.c.b16 %v852, %v850
    %v979 = vpack.c.b16 %v853, %v851
    %v980 = vpack.c.b16 %v856, %v854
    %v981 = vpack.c.b16 %v857, %v855
    %v982 = vpack.c.b16 %v860, %v858
    %v983 = vpack.c.b16 %v861, %v859
    %v984 = vpack.c.b16 %v864, %v862
    %v985 = vpack.c.b16 %v865, %v863
    %v986 = vpack.c.b16 %v868, %v866
    %v987 = vpack.c.b16 %v869, %v867
    %v988 = vpack.c.b16 %v872, %v870
    %v989 = vpack.c.b16 %v873, %v871
    %v990 = vpack.c.b16 %v876, %v874
    %v991 = vpack.c.b16 %v877, %v875
    %v992 = vpack.c.b16 %v880, %v878
    %v993 = vpack.c.b16 %v881, %v879
    %1106 = vmatprep.subr.bf16.mxu0 %v897
    %1107 = vmatpush1.bf16.msra.mxu0 %v896
    %1108 = vmatprep.subr.bf16.mxu0 %v895
    %1109 = vmatpush1.bf16.msra.mxu0 %v894
    %1110 = vmatprep.subr.bf16.mxu0 %v893
    %1111 = vmatpush1.bf16.msra.mxu0 %v892
    %1112 = vmatprep.subr.bf16.mxu0 %v891
    %1113 = vmatpush1.bf16.msra.mxu0 %v890
    %1114 = vmatprep.subr.bf16.mxu0 %v889
    %1115 = vmatpush1.bf16.msra.mxu0 %v888
    %1116 = vmatprep.subr.bf16.mxu0 %v887
    %1117 = vmatpush1.bf16.msra.mxu0 %v886
    %1118 = vmatprep.subr.bf16.mxu0 %v885
    %1119 = vmatpush1.bf16.msra.mxu0 %v884
    %1120 = vmatprep.subr.bf16.mxu0 %v883
    %1121 = vmatpush1.bf16.msra.mxu0 %v882
    %1122 = vmatprep.subr.bf16.mxu0 %v913
    %1123 = vmatpush2.bf16.msra.mxu0 %v912
    %1124 = vmatprep.subr.bf16.mxu0 %v911
    %1125 = vmatpush2.bf16.msra.mxu0 %v910
    %1126 = vmatprep.subr.bf16.mxu0 %v909
    %1127 = vmatpush2.bf16.msra.mxu0 %v908
    %1128 = vmatprep.subr.bf16.mxu0 %v907
    %1129 = vmatpush2.bf16.msra.mxu0 %v906
    %1130 = vmatprep.subr.bf16.mxu0 %v905
    %1131 = vmatpush2.bf16.msra.mxu0 %v904
    %1132 = vmatprep.subr.bf16.mxu0 %v903
    %1133 = vmatpush2.bf16.msra.mxu0 %v902
    %1134 = vmatprep.subr.bf16.mxu0 %v901
    %1135 = vmatpush2.bf16.msra.mxu0 %v900
    %1136 = vmatprep.subr.bf16.mxu0 %v899
    %1137 = vmatpush2.bf16.msra.mxu0 %v898
    %1138 = vmatprep.mubr.bf16.mxu0 %v435
    %1139 = vmatmul.mubr.bf16.gmra.mxu0 %v434
    %v1140 = vpop.f32.mrf.mxu0
    %v1141 = vadd.f32 %v251, %v1140
    %v1142 = vpop.f32.mrf.mxu0
    %v1143 = vadd.f32 %v255, %v1142
    %v1144 = vpop.f32.mrf.mxu0
    %v1145 = vadd.f32 %v251, %v1144
    %v1146 = vpop.f32.mrf.mxu0
    %v1147 = vadd.f32 %v255, %v1146
    %1148 = vmatprep.mubr.bf16.mxu0 %v442
    %1149 = vmatmul.mubr.bf16.gmra.mxu0 %v441
    %v1150 = vpop.f32.mrf.mxu0
    %v1151 = vadd.f32 %v251, %v1150
    %v1152 = vpop.f32.mrf.mxu0
    %v1153 = vadd.f32 %v255, %v1152
    %v1154 = vpop.f32.mrf.mxu0
    %v1155 = vadd.f32 %v251, %v1154
    %v1156 = vpop.f32.mrf.mxu0
    %v1157 = vadd.f32 %v255, %v1156
    %1158 = vmatprep.mubr.bf16.mxu0 %v449
    %1159 = vmatmul.mubr.bf16.gmra.mxu0 %v448
    %v1160 = vpop.f32.mrf.mxu0
    %v1161 = vadd.f32 %v251, %v1160
    %v1162 = vpop.f32.mrf.mxu0
    %v1163 = vadd.f32 %v255, %v1162
    %v1164 = vpop.f32.mrf.mxu0
    %v1165 = vadd.f32 %v251, %v1164
    %v1166 = vpop.f32.mrf.mxu0
    %v1167 = vadd.f32 %v255, %v1166
    %1168 = vmatprep.mubr.bf16.mxu0 %v456
    %1169 = vmatmul.mubr.bf16.gmra.mxu0 %v455
    %v1170 = vpop.f32.mrf.mxu0
    %v1171 = vadd.f32 %v251, %v1170
    %v1172 = vpop.f32.mrf.mxu0
    %v1173 = vadd.f32 %v255, %v1172
    %v1174 = vpop.f32.mrf.mxu0
    %v1175 = vadd.f32 %v251, %v1174
    %v1176 = vpop.f32.mrf.mxu0
    %v1177 = vadd.f32 %v255, %v1176
    %1178 = vmatprep.mubr.bf16.mxu0 %v463
    %1179 = vmatmul.mubr.bf16.gmra.mxu0 %v462
    %v1180 = vpop.f32.mrf.mxu0
    %v1181 = vadd.f32 %v251, %v1180
    %v1182 = vpop.f32.mrf.mxu0
    %v1183 = vadd.f32 %v255, %v1182
    %v1184 = vpop.f32.mrf.mxu0
    %v1185 = vadd.f32 %v251, %v1184
    %v1186 = vpop.f32.mrf.mxu0
    %v1187 = vadd.f32 %v255, %v1186
    %1188 = vmatprep.mubr.bf16.mxu0 %v470
    %1189 = vmatmul.mubr.bf16.gmra.mxu0 %v469
    %v1190 = vpop.f32.mrf.mxu0
    %v1191 = vadd.f32 %v251, %v1190
    %v1192 = vpop.f32.mrf.mxu0
    %v1193 = vadd.f32 %v255, %v1192
    %v1194 = vpop.f32.mrf.mxu0
    %v1195 = vadd.f32 %v251, %v1194
    %v1196 = vpop.f32.mrf.mxu0
    %v1197 = vadd.f32 %v255, %v1196
    %1198 = vmatprep.mubr.bf16.mxu0 %v477
    %1199 = vmatmul.mubr.bf16.gmra.mxu0 %v476
    %v1200 = vpop.f32.mrf.mxu0
    %v1201 = vadd.f32 %v251, %v1200
    %v1202 = vpop.f32.mrf.mxu0
    %v1203 = vadd.f32 %v255, %v1202
    %v1204 = vpop.f32.mrf.mxu0
    %v1205 = vadd.f32 %v251, %v1204
    %v1206 = vpop.f32.mrf.mxu0
    %v1207 = vadd.f32 %v255, %v1206
    %1208 = vmatprep.mubr.bf16.mxu0 %v484
    %1209 = vmatmul.mubr.bf16.gmra.mxu0 %v483
    %v1210 = vpop.f32.mrf.mxu0
    %v1211 = vadd.f32 %v251, %v1210
    %v1212 = vpop.f32.mrf.mxu0
    %v1213 = vadd.f32 %v255, %v1212
    %v1214 = vpop.f32.mrf.mxu0
    %v1215 = vadd.f32 %v251, %v1214
    %v1216 = vpop.f32.mrf.mxu0
    %v1217 = vadd.f32 %v255, %v1216
    %1218 = vdwg.mxu0
    %1219 = vmatprep.subr.bf16.mxu0 %v929
    %1220 = vmatpush1.bf16.msra.mxu0 %v928
    %1221 = vmatprep.subr.bf16.mxu0 %v927
    %1222 = vmatpush1.bf16.msra.mxu0 %v926
    %1223 = vmatprep.subr.bf16.mxu0 %v925
    %1224 = vmatpush1.bf16.msra.mxu0 %v924
    %1225 = vmatprep.subr.bf16.mxu0 %v923
    %1226 = vmatpush1.bf16.msra.mxu0 %v922
    %1227 = vmatprep.subr.bf16.mxu0 %v921
    %1228 = vmatpush1.bf16.msra.mxu0 %v920
    %1229 = vmatprep.subr.bf16.mxu0 %v919
    %1230 = vmatpush1.bf16.msra.mxu0 %v918
    %1231 = vmatprep.subr.bf16.mxu0 %v917
    %1232 = vmatpush1.bf16.msra.mxu0 %v916
    %1233 = vmatprep.subr.bf16.mxu0 %v915
    %1234 = vmatpush1.bf16.msra.mxu0 %v914
    %1235 = vmatprep.subr.bf16.mxu0 %v945
    %1236 = vmatpush2.bf16.msra.mxu0 %v944
    %1237 = vmatprep.subr.bf16.mxu0 %v943
    %1238 = vmatpush2.bf16.msra.mxu0 %v942
    %1239 = vmatprep.subr.bf16.mxu0 %v941
    %1240 = vmatpush2.bf16.msra.mxu0 %v940
    %1241 = vmatprep.subr.bf16.mxu0 %v939
    %1242 = vmatpush2.bf16.msra.mxu0 %v938
    %1243 = vmatprep.subr.bf16.mxu0 %v937
    %1244 = vmatpush2.bf16.msra.mxu0 %v936
    %1245 = vmatprep.subr.bf16.mxu0 %v935
    %1246 = vmatpush2.bf16.msra.mxu0 %v934
    %1247 = vmatprep.subr.bf16.mxu0 %v933
    %1248 = vmatpush2.bf16.msra.mxu0 %v932
    %1249 = vmatprep.subr.bf16.mxu0 %v931
    %1250 = vmatpush2.bf16.msra.mxu0 %v930
    %1251 = vmatprep.mubr.bf16.mxu0 %v437
    %1252 = vmatmul.mubr.bf16.gmra.mxu0 %v436
    %v1253 = vpop.f32.mrf.mxu0
    %v1254 = vadd.f32 %v1141, %v1253
    %v1255 = vpop.f32.mrf.mxu0
    %v1256 = vadd.f32 %v1143, %v1255
    %v1257 = vpop.f32.mrf.mxu0
    %v1258 = vadd.f32 %v1145, %v1257
    %v1259 = vpop.f32.mrf.mxu0
    %v1260 = vadd.f32 %v1147, %v1259
    %1261 = vmatprep.mubr.bf16.mxu0 %v444
    %1262 = vmatmul.mubr.bf16.gmra.mxu0 %v443
    %v1263 = vpop.f32.mrf.mxu0
    %v1264 = vadd.f32 %v1151, %v1263
    %v1265 = vpop.f32.mrf.mxu0
    %v1266 = vadd.f32 %v1153, %v1265
    %v1267 = vpop.f32.mrf.mxu0
    %v1268 = vadd.f32 %v1155, %v1267
    %v1269 = vpop.f32.mrf.mxu0
    %v1270 = vadd.f32 %v1157, %v1269
    %1271 = vmatprep.mubr.bf16.mxu0 %v451
    %1272 = vmatmul.mubr.bf16.gmra.mxu0 %v450
    %v1273 = vpop.f32.mrf.mxu0
    %v1274 = vadd.f32 %v1161, %v1273
    %v1275 = vpop.f32.mrf.mxu0
    %v1276 = vadd.f32 %v1163, %v1275
    %v1277 = vpop.f32.mrf.mxu0
    %v1278 = vadd.f32 %v1165, %v1277
    %v1279 = vpop.f32.mrf.mxu0
    %v1280 = vadd.f32 %v1167, %v1279
    %1281 = vmatprep.mubr.bf16.mxu0 %v458
    %1282 = vmatmul.mubr.bf16.gmra.mxu0 %v457
    %v1283 = vpop.f32.mrf.mxu0
    %v1284 = vadd.f32 %v1171, %v1283
    %v1285 = vpop.f32.mrf.mxu0
    %v1286 = vadd.f32 %v1173, %v1285
    %v1287 = vpop.f32.mrf.mxu0
    %v1288 = vadd.f32 %v1175, %v1287
    %v1289 = vpop.f32.mrf.mxu0
    %v1290 = vadd.f32 %v1177, %v1289
    %1291 = vmatprep.mubr.bf16.mxu0 %v465
    %1292 = vmatmul.mubr.bf16.gmra.mxu0 %v464
    %v1293 = vpop.f32.mrf.mxu0
    %v1294 = vadd.f32 %v1181, %v1293
    %v1295 = vpop.f32.mrf.mxu0
    %v1296 = vadd.f32 %v1183, %v1295
    %v1297 = vpop.f32.mrf.mxu0
    %v1298 = vadd.f32 %v1185, %v1297
    %v1299 = vpop.f32.mrf.mxu0
    %v1300 = vadd.f32 %v1187, %v1299
    %1301 = vmatprep.mubr.bf16.mxu0 %v472
    %1302 = vmatmul.mubr.bf16.gmra.mxu0 %v471
    %v1303 = vpop.f32.mrf.mxu0
    %v1304 = vadd.f32 %v1191, %v1303
    %v1305 = vpop.f32.mrf.mxu0
    %v1306 = vadd.f32 %v1193, %v1305
    %v1307 = vpop.f32.mrf.mxu0
    %v1308 = vadd.f32 %v1195, %v1307
    %v1309 = vpop.f32.mrf.mxu0
    %v1310 = vadd.f32 %v1197, %v1309
    %1311 = vmatprep.mubr.bf16.mxu0 %v479
    %1312 = vmatmul.mubr.bf16.gmra.mxu0 %v478
    %v1313 = vpop.f32.mrf.mxu0
    %v1314 = vadd.f32 %v1201, %v1313
    %v1315 = vpop.f32.mrf.mxu0
    %v1316 = vadd.f32 %v1203, %v1315
    %v1317 = vpop.f32.mrf.mxu0
    %v1318 = vadd.f32 %v1205, %v1317
    %v1319 = vpop.f32.mrf.mxu0
    %v1320 = vadd.f32 %v1207, %v1319
    %1321 = vmatprep.mubr.bf16.mxu0 %v486
    %1322 = vmatmul.mubr.bf16.gmra.mxu0 %v485
    %v1323 = vpop.f32.mrf.mxu0
    %v1324 = vadd.f32 %v1211, %v1323
    %v1325 = vpop.f32.mrf.mxu0
    %v1326 = vadd.f32 %v1213, %v1325
    %v1327 = vpop.f32.mrf.mxu0
    %v1328 = vadd.f32 %v1215, %v1327
    %v1329 = vpop.f32.mrf.mxu0
    %v1330 = vadd.f32 %v1217, %v1329
    %1331 = vdwg.mxu0
    %1332 = vmatprep.subr.bf16.mxu0 %v961
    %1333 = vmatpush1.bf16.msra.mxu0 %v960
    %1334 = vmatprep.subr.bf16.mxu0 %v959
    %1335 = vmatpush1.bf16.msra.mxu0 %v958
    %1336 = vmatprep.subr.bf16.mxu0 %v957
    %1337 = vmatpush1.bf16.msra.mxu0 %v956
    %1338 = vmatprep.subr.bf16.mxu0 %v955
    %1339 = vmatpush1.bf16.msra.mxu0 %v954
    %1340 = vmatprep.subr.bf16.mxu0 %v953
    %1341 = vmatpush1.bf16.msra.mxu0 %v952
    %1342 = vmatprep.subr.bf16.mxu0 %v951
    %1343 = vmatpush1.bf16.msra.mxu0 %v950
    %1344 = vmatprep.subr.bf16.mxu0 %v949
    %1345 = vmatpush1.bf16.msra.mxu0 %v948
    %1346 = vmatprep.subr.bf16.mxu0 %v947
    %1347 = vmatpush1.bf16.msra.mxu0 %v946
    %1348 = vmatprep.subr.bf16.mxu0 %v977
    %1349 = vmatpush2.bf16.msra.mxu0 %v976
    %1350 = vmatprep.subr.bf16.mxu0 %v975
    %1351 = vmatpush2.bf16.msra.mxu0 %v974
    %1352 = vmatprep.subr.bf16.mxu0 %v973
    %1353 = vmatpush2.bf16.msra.mxu0 %v972
    %1354 = vmatprep.subr.bf16.mxu0 %v971
    %1355 = vmatpush2.bf16.msra.mxu0 %v970
    %1356 = vmatprep.subr.bf16.mxu0 %v969
    %1357 = vmatpush2.bf16.msra.mxu0 %v968
    %1358 = vmatprep.subr.bf16.mxu0 %v967
    %1359 = vmatpush2.bf16.msra.mxu0 %v966
    %1360 = vmatprep.subr.bf16.mxu0 %v965
    %1361 = vmatpush2.bf16.msra.mxu0 %v964
    %1362 = vmatprep.subr.bf16.mxu0 %v963
    %1363 = vmatpush2.bf16.msra.mxu0 %v962
    %1364 = vmatprep.mubr.bf16.mxu0 %v439
    %1365 = vmatmul.mubr.bf16.gmra.mxu0 %v438
    %v1366 = vpop.f32.mrf.mxu0
    %v1367 = vadd.f32 %v1254, %v1366
    %v1368 = vpop.f32.mrf.mxu0
    %v1369 = vadd.f32 %v1256, %v1368
    %v1370 = vpop.f32.mrf.mxu0
    %v1371 = vadd.f32 %v1258, %v1370
    %v1372 = vpop.f32.mrf.mxu0
    %v1373 = vadd.f32 %v1260, %v1372
    %1374 = vmatprep.mubr.bf16.mxu0 %v446
    %1375 = vmatmul.mubr.bf16.gmra.mxu0 %v445
    %v1376 = vpop.f32.mrf.mxu0
    %v1377 = vadd.f32 %v1264, %v1376
    %v1378 = vpop.f32.mrf.mxu0
    %v1379 = vadd.f32 %v1266, %v1378
    %v1380 = vpop.f32.mrf.mxu0
    %v1381 = vadd.f32 %v1268, %v1380
    %v1382 = vpop.f32.mrf.mxu0
    %v1383 = vadd.f32 %v1270, %v1382
    %1384 = vmatprep.mubr.bf16.mxu0 %v453
    %1385 = vmatmul.mubr.bf16.gmra.mxu0 %v452
    %v1386 = vpop.f32.mrf.mxu0
    %v1387 = vadd.f32 %v1274, %v1386
    %v1388 = vpop.f32.mrf.mxu0
    %v1389 = vadd.f32 %v1276, %v1388
    %v1390 = vpop.f32.mrf.mxu0
    %v1391 = vadd.f32 %v1278, %v1390
    %v1392 = vpop.f32.mrf.mxu0
    %v1393 = vadd.f32 %v1280, %v1392
    %1394 = vmatprep.mubr.bf16.mxu0 %v460
    %1395 = vmatmul.mubr.bf16.gmra.mxu0 %v459
    %v1396 = vpop.f32.mrf.mxu0
    %v1397 = vadd.f32 %v1284, %v1396
    %v1398 = vpop.f32.mrf.mxu0
    %v1399 = vadd.f32 %v1286, %v1398
    %v1400 = vpop.f32.mrf.mxu0
    %v1401 = vadd.f32 %v1288, %v1400
    %v1402 = vpop.f32.mrf.mxu0
    %v1403 = vadd.f32 %v1290, %v1402
    %1404 = vmatprep.mubr.bf16.mxu0 %v467
    %1405 = vmatmul.mubr.bf16.gmra.mxu0 %v466
    %v1406 = vpop.f32.mrf.mxu0
    %v1407 = vadd.f32 %v1294, %v1406
    %v1408 = vpop.f32.mrf.mxu0
    %v1409 = vadd.f32 %v1296, %v1408
    %v1410 = vpop.f32.mrf.mxu0
    %v1411 = vadd.f32 %v1298, %v1410
    %v1412 = vpop.f32.mrf.mxu0
    %v1413 = vadd.f32 %v1300, %v1412
    %1414 = vmatprep.mubr.bf16.mxu0 %v474
    %1415 = vmatmul.mubr.bf16.gmra.mxu0 %v473
    %v1416 = vpop.f32.mrf.mxu0
    %v1417 = vadd.f32 %v1304, %v1416
    %v1418 = vpop.f32.mrf.mxu0
    %v1419 = vadd.f32 %v1306, %v1418
    %v1420 = vpop.f32.mrf.mxu0
    %v1421 = vadd.f32 %v1308, %v1420
    %v1422 = vpop.f32.mrf.mxu0
    %v1423 = vadd.f32 %v1310, %v1422
    %1424 = vmatprep.mubr.bf16.mxu0 %v481
    %1425 = vmatmul.mubr.bf16.gmra.mxu0 %v480
    %v1426 = vpop.f32.mrf.mxu0
    %v1427 = vadd.f32 %v1314, %v1426
    %v1428 = vpop.f32.mrf.mxu0
    %v1429 = vadd.f32 %v1316, %v1428
    %v1430 = vpop.f32.mrf.mxu0
    %v1431 = vadd.f32 %v1318, %v1430
    %v1432 = vpop.f32.mrf.mxu0
    %v1433 = vadd.f32 %v1320, %v1432
    %1434 = vmatprep.mubr.bf16.mxu0 %v488
    %1435 = vmatmul.mubr.bf16.gmra.mxu0 %v487
    %v1436 = vpop.f32.mrf.mxu0
    %v1437 = vadd.f32 %v1324, %v1436
    %v1438 = vpop.f32.mrf.mxu0
    %v1439 = vadd.f32 %v1326, %v1438
    %v1440 = vpop.f32.mrf.mxu0
    %v1441 = vadd.f32 %v1328, %v1440
    %v1442 = vpop.f32.mrf.mxu0
    %v1443 = vadd.f32 %v1330, %v1442
    %1444 = vdwg.mxu0
    %1445 = vmatprep.subr.bf16.mxu0 %v993
    %1446 = vmatpush1.bf16.msra.mxu0 %v992
    %1447 = vmatprep.subr.bf16.mxu0 %v991
    %1448 = vmatpush1.bf16.msra.mxu0 %v990
    %1449 = vmatprep.subr.bf16.mxu0 %v989
    %1450 = vmatpush1.bf16.msra.mxu0 %v988
    %1451 = vmatprep.subr.bf16.mxu0 %v987
    %1452 = vmatpush1.bf16.msra.mxu0 %v986
    %1453 = vmatprep.subr.bf16.mxu0 %v985
    %1454 = vmatpush1.bf16.msra.mxu0 %v984
    %1455 = vmatprep.subr.bf16.mxu0 %v983
    %1456 = vmatpush1.bf16.msra.mxu0 %v982
    %1457 = vmatprep.subr.bf16.mxu0 %v981
    %1458 = vmatpush1.bf16.msra.mxu0 %v980
    %1459 = vmatprep.subr.bf16.mxu0 %v979
    %1460 = vmatpush1.bf16.msra.mxu0 %v978
    %1461 = vmatprep.subr.bf16.mxu0 0
    %1462 = vmatpush2.bf16.msra.mxu0 0
    %1463 = vmatprep.subr.bf16.mxu0 0
    %1464 = vmatpush2.bf16.msra.mxu0 0
    %1465 = vmatprep.subr.bf16.mxu0 0
    %1466 = vmatpush2.bf16.msra.mxu0 0
    %1467 = vmatprep.subr.bf16.mxu0 0
    %1468 = vmatpush2.bf16.msra.mxu0 0
    %1469 = vmatprep.subr.bf16.mxu0 0
    %1470 = vmatpush2.bf16.msra.mxu0 0
    %1471 = vmatprep.subr.bf16.mxu0 0
    %1472 = vmatpush2.bf16.msra.mxu0 0
    %1473 = vmatprep.subr.bf16.mxu0 0
    %1474 = vmatpush2.bf16.msra.mxu0 0
    %1475 = vmatprep.subr.bf16.mxu0 0
    %1476 = vmatpush2.bf16.msra.mxu0 0
    %1477 = vmatprep.mubr.bf16.mxu0 0
    %1478 = vmatmul.mubr.bf16.gmra.mxu0 %v440
    %v1479 = vpop.f32.mrf.mxu0
    %v1480 = vadd.f32 %v1367, %v1479
    %v1481 = vpop.f32.mrf.mxu0
    %v1482 = vadd.f32 %v1369, %v1481
    %v1483 = vpop.f32.mrf.mxu0
    %v1484 = vadd.f32 %v1371, %v1483
    %v1485 = vpop.f32.mrf.mxu0
    %v1486 = vadd.f32 %v1373, %v1485
    %1487 = vmatprep.mubr.bf16.mxu0 0
    %1488 = vmatmul.mubr.bf16.gmra.mxu0 %v447
    %v1489 = vpop.f32.mrf.mxu0
    %v1490 = vadd.f32 %v1377, %v1489
    %v1491 = vpop.f32.mrf.mxu0
    %v1492 = vadd.f32 %v1379, %v1491
    %v1493 = vpop.f32.mrf.mxu0
    %v1494 = vadd.f32 %v1381, %v1493
    %v1495 = vpop.f32.mrf.mxu0
    %v1496 = vadd.f32 %v1383, %v1495
    %1497 = vmatprep.mubr.bf16.mxu0 0
    %1498 = vmatmul.mubr.bf16.gmra.mxu0 %v454
    %v1499 = vpop.f32.mrf.mxu0
    %v1500 = vadd.f32 %v1387, %v1499
    %v1501 = vpop.f32.mrf.mxu0
    %v1502 = vadd.f32 %v1389, %v1501
    %v1503 = vpop.f32.mrf.mxu0
    %v1504 = vadd.f32 %v1391, %v1503
    %v1505 = vpop.f32.mrf.mxu0
    %v1506 = vadd.f32 %v1393, %v1505
    %1507 = vmatprep.mubr.bf16.mxu0 0
    %1508 = vmatmul.mubr.bf16.gmra.mxu0 %v461
    %v1509 = vpop.f32.mrf.mxu0
    %v1510 = vadd.f32 %v1397, %v1509
    %v1511 = vpop.f32.mrf.mxu0
    %v1512 = vadd.f32 %v1399, %v1511
    %v1513 = vpop.f32.mrf.mxu0
    %v1514 = vadd.f32 %v1401, %v1513
    %v1515 = vpop.f32.mrf.mxu0
    %v1516 = vadd.f32 %v1403, %v1515
    %1517 = vmatprep.mubr.bf16.mxu0 0
    %1518 = vmatmul.mubr.bf16.gmra.mxu0 %v468
    %v1519 = vpop.f32.mrf.mxu0
    %v1520 = vadd.f32 %v1407, %v1519
    %v1521 = vpop.f32.mrf.mxu0
    %v1522 = vadd.f32 %v1409, %v1521
    %v1523 = vpop.f32.mrf.mxu0
    %v1524 = vadd.f32 %v1411, %v1523
    %v1525 = vpop.f32.mrf.mxu0
    %v1526 = vadd.f32 %v1413, %v1525
    %1527 = vmatprep.mubr.bf16.mxu0 0
    %1528 = vmatmul.mubr.bf16.gmra.mxu0 %v475
    %v1529 = vpop.f32.mrf.mxu0
    %v1530 = vadd.f32 %v1417, %v1529
    %v1531 = vpop.f32.mrf.mxu0
    %v1532 = vadd.f32 %v1419, %v1531
    %v1533 = vpop.f32.mrf.mxu0
    %v1534 = vadd.f32 %v1421, %v1533
    %v1535 = vpop.f32.mrf.mxu0
    %v1536 = vadd.f32 %v1423, %v1535
    %1537 = vmatprep.mubr.bf16.mxu0 0
    %1538 = vmatmul.mubr.bf16.gmra.mxu0 %v482
    %v1539 = vpop.f32.mrf.mxu0
    %v1540 = vadd.f32 %v1427, %v1539
    %v1541 = vpop.f32.mrf.mxu0
    %v1542 = vadd.f32 %v1429, %v1541
    %v1543 = vpop.f32.mrf.mxu0
    %v1544 = vadd.f32 %v1431, %v1543
    %v1545 = vpop.f32.mrf.mxu0
    %v1546 = vadd.f32 %v1433, %v1545
    %1547 = vmatprep.mubr.bf16.mxu0 0
    %1548 = vmatmul.mubr.bf16.gmra.mxu0 %v489
    %v1549 = vpop.f32.mrf.mxu0
    %v1550 = vadd.f32 %v1437, %v1549
    %v1551 = vpop.f32.mrf.mxu0
    %v1552 = vadd.f32 %v1439, %v1551
    %v1553 = vpop.f32.mrf.mxu0
    %v1554 = vadd.f32 %v1441, %v1553
    %v1555 = vpop.f32.mrf.mxu0
    %v1556 = vadd.f32 %v1443, %v1555
    %1557 = vdwg.mxu0
    %v1558 = vmax.f32 %v1480, 0.0
    %v1559 = vmax.f32 %v1482, 0.0
    %v1560 = vmax.f32 %v1484, 0.0
    %v1561 = vmax.f32 %v1486, 0.0
    %v1562 = vmax.f32 %v1490, 0.0
    %v1563 = vmax.f32 %v1492, 0.0
    %v1564 = vmax.f32 %v1494, 0.0
    %v1565 = vmax.f32 %v1496, 0.0
    %v1566 = vmax.f32 %v1500, 0.0
    %v1567 = vmax.f32 %v1502, 0.0
    %v1568 = vmax.f32 %v1504, 0.0
    %v1569 = vmax.f32 %v1506, 0.0
    %v1570 = vmax.f32 %v1510, 0.0
    %v1571 = vmax.f32 %v1512, 0.0
    %v1572 = vmax.f32 %v1514, 0.0
    %v1573 = vmax.f32 %v1516, 0.0
    %v1574 = vmax.f32 %v1520, 0.0
    %v1575 = vmax.f32 %v1522, 0.0
    %v1576 = vmax.f32 %v1524, 0.0
    %v1577 = vmax.f32 %v1526, 0.0
    %v1578 = vmax.f32 %v1530, 0.0
    %v1579 = vmax.f32 %v1532, 0.0
    %v1580 = vmax.f32 %v1534, 0.0
    %v1581 = vmax.f32 %v1536, 0.0
    %v1582 = vmax.f32 %v1540, 0.0
    %v1583 = vmax.f32 %v1542, 0.0
    %v1584 = vmax.f32 %v1544, 0.0
    %v1585 = vmax.f32 %v1546, 0.0
    %v1586 = vmax.f32 %v1550, 0.0
    %v1587 = vmax.f32 %v1552, 0.0
    %v1588 = vmax.f32 %v1554, 0.0
    %v1589 = vmax.f32 %v1556, 0.0
    %v1590 = vpack.c.bf16 %v1560, %v1558
    %v1591 = vpack.c.bf16 %v1561, %v1559
    %v1592 = vpack.c.bf16 %v1564, %v1562
    %v1593 = vpack.c.bf16 %v1565, %v1563
    %v1594 = vpack.c.bf16 %v1568, %v1566
    %v1595 = vpack.c.bf16 %v1569, %v1567
    %v1596 = vpack.c.bf16 %v1572, %v1570
    %v1597 = vpack.c.bf16 %v1573, %v1571
    %v1598 = vpack.c.bf16 %v1576, %v1574
    %v1599 = vpack.c.bf16 %v1577, %v1575
    %v1600 = vpack.c.bf16 %v1580, %v1578
    %v1601 = vpack.c.bf16 %v1581, %v1579
    %v1602 = vpack.c.bf16 %v1584, %v1582
    %v1603 = vpack.c.bf16 %v1585, %v1583
    %v1604 = vpack.c.bf16 %v1588, %v1586
    %v1605 = vpack.c.bf16 %v1589, %v1587
    %v1606 = vld [vmem:[#allocation8] sm:$0xf]
    %v1607 = vld [vmem:[#allocation8 + $0x4] sm:$0xf]
    %v1608 = vld [vmem:[#allocation8 + $0x8] sm:$0xf]
    %v1609 = vld [vmem:[#allocation8 + $0xc] sm:$0xf]
    %v1610 = vld [vmem:[#allocation8 + $0x10] sm:$0xf]
    %v1611 = vld [vmem:[#allocation8 + $0x14] sm:$0xf]
    %v1612 = vld [vmem:[#allocation8 + $0x18] sm:$0xf]
    %v1613 = vld [vmem:[#allocation8 + $0x1c] sm:$0xf]
    %v1614 = vld [vmem:[#allocation8 + $0x20] sm:$0xf]
    %v1615 = vld [vmem:[#allocation8 + $0x24] sm:$0xf]
    %v1616 = vld [vmem:[#allocation8 + $0x28] sm:$0xf]
    %v1617 = vld [vmem:[#allocation8 + $0x2c] sm:$0xf]
    %v1618 = vld [vmem:[#allocation8 + $0x30] sm:$0xf]
    %v1619 = vld [vmem:[#allocation8 + $0x34] sm:$0xf]
    %v1620 = vld [vmem:[#allocation8 + $0x38] sm:$0xf]
    %v1621 = vld [vmem:[#allocation8 + $0x3c] sm:$0xf]
    %v1622 = vld [vmem:[#allocation8 + $0x40] sm:$0xf]
    %v1623 = vld [vmem:[#allocation8 + $0x44] sm:$0xf]
    %v1624 = vld [vmem:[#allocation8 + $0x48] sm:$0xf]
    %v1625 = vld [vmem:[#allocation8 + $0x4c] sm:$0xf]
    %v1626 = vld [vmem:[#allocation8 + $0x50] sm:$0xf]
    %v1627 = vld [vmem:[#allocation8 + $0x54] sm:$0xf]
    %v1628 = vld [vmem:[#allocation8 + $0x58] sm:$0xf]
    %v1629 = vld [vmem:[#allocation8 + $0x5c] sm:$0xf]
    %v1630 = vld [vmem:[#allocation8 + $0x60] sm:$0xf]
    %v1631 = vld [vmem:[#allocation8 + $0x64] sm:$0xf]
    %v1632 = vld [vmem:[#allocation8 + $0x68] sm:$0xf]
    %v1633 = vld [vmem:[#allocation8 + $0x6c] sm:$0xf]
    %v1634 = vld [vmem:[#allocation8 + $0x70] sm:$0xf]
    %v1635 = vld [vmem:[#allocation8 + $0x74] sm:$0xf]
    %v1636 = vld [vmem:[#allocation8 + $0x78] sm:$0xf]
    %v1637 = vld [vmem:[#allocation8 + $0x7c] sm:$0xf]
    %v1638 = vld [vmem:[%s4] sm:$0x1]
    %v1640 = vlaneseq
    %v1641 = vshrl.u32 %v1640, 7
    %v1642 = vsub.s32 0, %v1641
    %v1643 = vrot.slane %v1638, %v1642
    %v1677 = vunpack.c.l.b16 %v1606
    %v1678 = vunpack.c.l.b16 %v1607
    %v1679 = vunpack.c.l.b16 %v1608
    %v1680 = vunpack.c.l.b16 %v1609
    %v1681 = vunpack.c.l.b16 %v1610
    %v1682 = vunpack.c.l.b16 %v1611
    %v1683 = vunpack.c.l.b16 %v1612
    %v1684 = vunpack.c.l.b16 %v1613
    %v1685 = vunpack.c.l.b16 %v1614
    %v1686 = vunpack.c.l.b16 %v1615
    %v1687 = vunpack.c.l.b16 %v1616
    %v1688 = vunpack.c.l.b16 %v1617
    %v1689 = vunpack.c.l.b16 %v1618
    %v1690 = vunpack.c.l.b16 %v1619
    %v1691 = vunpack.c.l.b16 %v1620
    %v1692 = vunpack.c.l.b16 %v1621
    %v1693 = vunpack.c.l.b16 %v1622
    %v1694 = vunpack.c.l.b16 %v1623
    %v1695 = vunpack.c.l.b16 %v1624
    %v1696 = vunpack.c.l.b16 %v1625
    %v1697 = vunpack.c.l.b16 %v1626
    %v1698 = vunpack.c.l.b16 %v1627
    %v1699 = vunpack.c.l.b16 %v1628
    %v1700 = vunpack.c.l.b16 %v1629
    %v1701 = vunpack.c.l.b16 %v1630
    %v1702 = vunpack.c.l.b16 %v1631
    %v1703 = vunpack.c.l.b16 %v1632
    %v1704 = vunpack.c.l.b16 %v1633
    %v1705 = vunpack.c.l.b16 %v1634
    %v1706 = vunpack.c.l.b16 %v1635
    %v1707 = vunpack.c.l.b16 %v1636
    %v1708 = vunpack.c.l.b16 %v1637
    %v1709 = vpack.c.b16 %v1678, %v1677
    %v1710 = vpack.c.b16 %v1680, %v1679
    %v1711 = vpack.c.b16 %v1682, %v1681
    %v1712 = vpack.c.b16 %v1684, %v1683
    %v1713 = vpack.c.b16 %v1686, %v1685
    %v1714 = vpack.c.b16 %v1688, %v1687
    %v1715 = vpack.c.b16 %v1690, %v1689
    %v1716 = vpack.c.b16 %v1692, %v1691
    %v1717 = vpack.c.b16 %v1694, %v1693
    %v1718 = vpack.c.b16 %v1696, %v1695
    %v1719 = vpack.c.b16 %v1698, %v1697
    %v1720 = vpack.c.b16 %v1700, %v1699
    %v1721 = vpack.c.b16 %v1702, %v1701
    %v1722 = vpack.c.b16 %v1704, %v1703
    %v1723 = vpack.c.b16 %v1706, %v1705
    %v1724 = vpack.c.b16 %v1708, %v1707
    %1741 = vmatprep.subr.bf16.mxu0 0
    %1742 = vmatpush1.bf16.msra.mxu0 %v1716
    %1743 = vmatprep.subr.bf16.mxu0 0
    %1744 = vmatpush1.bf16.msra.mxu0 %v1715
    %1745 = vmatprep.subr.bf16.mxu0 0
    %1746 = vmatpush1.bf16.msra.mxu0 %v1714
    %1747 = vmatprep.subr.bf16.mxu0 0
    %1748 = vmatpush1.bf16.msra.mxu0 %v1713
    %1749 = vmatprep.subr.bf16.mxu0 0
    %1750 = vmatpush1.bf16.msra.mxu0 %v1712
    %1751 = vmatprep.subr.bf16.mxu0 0
    %1752 = vmatpush1.bf16.msra.mxu0 %v1711
    %1753 = vmatprep.subr.bf16.mxu0 0
    %1754 = vmatpush1.bf16.msra.mxu0 %v1710
    %1755 = vmatprep.subr.bf16.mxu0 0
    %1756 = vmatpush1.bf16.msra.mxu0 %v1709
    %1757 = vmatprep.subr.bf16.mxu0 0
    %1758 = vmatpush2.bf16.msra.mxu0 %v1724
    %1759 = vmatprep.subr.bf16.mxu0 0
    %1760 = vmatpush2.bf16.msra.mxu0 %v1723
    %1761 = vmatprep.subr.bf16.mxu0 0
    %1762 = vmatpush2.bf16.msra.mxu0 %v1722
    %1763 = vmatprep.subr.bf16.mxu0 0
    %1764 = vmatpush2.bf16.msra.mxu0 %v1721
    %1765 = vmatprep.subr.bf16.mxu0 0
    %1766 = vmatpush2.bf16.msra.mxu0 %v1720
    %1767 = vmatprep.subr.bf16.mxu0 0
    %1768 = vmatpush2.bf16.msra.mxu0 %v1719
    %1769 = vmatprep.subr.bf16.mxu0 0
    %1770 = vmatpush2.bf16.msra.mxu0 %v1718
    %1771 = vmatprep.subr.bf16.mxu0 0
    %1772 = vmatpush2.bf16.msra.mxu0 %v1717
    %1773 = vmatprep.mubr.bf16.mxu0 %v1591
    %1774 = vmatmul.mubr.bf16.gmra.mxu0 %v1590
    %v1775 = vpop.f32.mrf.mxu0
    %v1776 = vadd.f32 %v1643, %v1775
    %v1777 = vpop.f32.mrf.mxu0
    %v1778 = vpop.f32.mrf.mxu0
    %v1779 = vadd.f32 %v1643, %v1778
    %v1780 = vpop.f32.mrf.mxu0
    %1781 = vmatprep.mubr.bf16.mxu0 %v1593
    %1782 = vmatmul.mubr.bf16.gmra.mxu0 %v1592
    %v1783 = vpop.f32.mrf.mxu0
    %v1784 = vadd.f32 %v1643, %v1783
    %v1785 = vpop.f32.mrf.mxu0
    %v1786 = vpop.f32.mrf.mxu0
    %v1787 = vadd.f32 %v1643, %v1786
    %v1788 = vpop.f32.mrf.mxu0
    %1789 = vmatprep.mubr.bf16.mxu0 %v1595
    %1790 = vmatmul.mubr.bf16.gmra.mxu0 %v1594
    %v1791 = vpop.f32.mrf.mxu0
    %v1792 = vadd.f32 %v1643, %v1791
    %v1793 = vpop.f32.mrf.mxu0
    %v1794 = vpop.f32.mrf.mxu0
    %v1795 = vadd.f32 %v1643, %v1794
    %v1796 = vpop.f32.mrf.mxu0
    %1797 = vmatprep.mubr.bf16.mxu0 %v1597
    %1798 = vmatmul.mubr.bf16.gmra.mxu0 %v1596
    %v1799 = vpop.f32.mrf.mxu0
    %v1800 = vadd.f32 %v1643, %v1799
    %v1801 = vpop.f32.mrf.mxu0
    %v1802 = vpop.f32.mrf.mxu0
    %v1803 = vadd.f32 %v1643, %v1802
    %v1804 = vpop.f32.mrf.mxu0
    %1805 = vmatprep.mubr.bf16.mxu0 %v1599
    %1806 = vmatmul.mubr.bf16.gmra.mxu0 %v1598
    %v1807 = vpop.f32.mrf.mxu0
    %v1808 = vadd.f32 %v1643, %v1807
    %v1809 = vpop.f32.mrf.mxu0
    %v1810 = vpop.f32.mrf.mxu0
    %v1811 = vadd.f32 %v1643, %v1810
    %v1812 = vpop.f32.mrf.mxu0
    %1813 = vmatprep.mubr.bf16.mxu0 %v1601
    %1814 = vmatmul.mubr.bf16.gmra.mxu0 %v1600
    %v1815 = vpop.f32.mrf.mxu0
    %v1816 = vadd.f32 %v1643, %v1815
    %v1817 = vpop.f32.mrf.mxu0
    %v1818 = vpop.f32.mrf.mxu0
    %v1819 = vadd.f32 %v1643, %v1818
    %v1820 = vpop.f32.mrf.mxu0
    %1821 = vmatprep.mubr.bf16.mxu0 %v1603
    %1822 = vmatmul.mubr.bf16.gmra.mxu0 %v1602
    %v1823 = vpop.f32.mrf.mxu0
    %v1824 = vadd.f32 %v1643, %v1823
    %v1825 = vpop.f32.mrf.mxu0
    %v1826 = vpop.f32.mrf.mxu0
    %v1827 = vadd.f32 %v1643, %v1826
    %v1828 = vpop.f32.mrf.mxu0
    %1829 = vmatprep.mubr.bf16.mxu0 %v1605
    %1830 = vmatmul.mubr.bf16.gmra.mxu0 %v1604
    %v1831 = vpop.f32.mrf.mxu0
    %v1832 = vadd.f32 %v1643, %v1831
    %v1833 = vpop.f32.mrf.mxu0
    %v1834 = vpop.f32.mrf.mxu0
    %v1835 = vadd.f32 %v1643, %v1834
    %v1836 = vpop.f32.mrf.mxu0
    %1837 = vdwg.mxu0
    %v1838 = vmax.f32 %v1776, 0.0
    %v1839 = vmax.f32 %v1779, 0.0
    %v1840 = vmax.f32 %v1784, 0.0
    %v1841 = vmax.f32 %v1787, 0.0
    %v1842 = vmax.f32 %v1792, 0.0
    %v1843 = vmax.f32 %v1795, 0.0
    %v1844 = vmax.f32 %v1800, 0.0
    %v1845 = vmax.f32 %v1803, 0.0
    %v1846 = vmax.f32 %v1808, 0.0
    %v1847 = vmax.f32 %v1811, 0.0
    %v1848 = vmax.f32 %v1816, 0.0
    %v1849 = vmax.f32 %v1819, 0.0
    %v1850 = vmax.f32 %v1824, 0.0
    %v1851 = vmax.f32 %v1827, 0.0
    %v1852 = vmax.f32 %v1832, 0.0
    %v1853 = vmax.f32 %v1835, 0.0
    %v1854 = vld [vmem:[%s5] sm:$0x1]
    %v1856 = vlaneseq
    %v1857 = vshrl.u32 %v1856, 7
    %v1858 = vsub.s32 0, %v1857
    %v1859 = vrot.slane %v1854, %v1858
    %v1861 = vmul.f32 %v1838, %v1859
    %v1862 = vmul.f32 %v1839, %v1859
    %v1863 = vmul.f32 %v1840, %v1859
    %v1864 = vmul.f32 %v1841, %v1859
    %v1865 = vmul.f32 %v1842, %v1859
    %v1866 = vmul.f32 %v1843, %v1859
    %v1867 = vmul.f32 %v1844, %v1859
    %v1868 = vmul.f32 %v1845, %v1859
    %v1869 = vmul.f32 %v1846, %v1859
    %v1870 = vmul.f32 %v1847, %v1859
    %v1871 = vmul.f32 %v1848, %v1859
    %v1872 = vmul.f32 %v1849, %v1859
    %v1873 = vmul.f32 %v1850, %v1859
    %v1874 = vmul.f32 %v1851, %v1859
    %v1875 = vmul.f32 %v1852, %v1859
    %v1876 = vmul.f32 %v1853, %v1859
    %1877 = vadd.xlane.f32.xlu0 %v1861
    %v1878 = vpop.xlane.xlu0 %1877
    %1879 = vadd.xlane.f32.xlu0 %v1862
    %v1880 = vpop.xlane.xlu0 %1879
    %1881 = vadd.xlane.f32.xlu0 %v1863
    %v1882 = vpop.xlane.xlu0 %1881
    %1883 = vadd.xlane.f32.xlu0 %v1864
    %v1884 = vpop.xlane.xlu0 %1883
    %1885 = vadd.xlane.f32.xlu0 %v1865
    %v1886 = vpop.xlane.xlu0 %1885
    %1887 = vadd.xlane.f32.xlu0 %v1866
    %v1888 = vpop.xlane.xlu0 %1887
    %1889 = vadd.xlane.f32.xlu0 %v1867
    %v1890 = vpop.xlane.xlu0 %1889
    %1891 = vadd.xlane.f32.xlu0 %v1868
    %v1892 = vpop.xlane.xlu0 %1891
    %1893 = vadd.xlane.f32.xlu0 %v1869
    %v1894 = vpop.xlane.xlu0 %1893
    %1895 = vadd.xlane.f32.xlu0 %v1870
    %v1896 = vpop.xlane.xlu0 %1895
    %1897 = vadd.xlane.f32.xlu0 %v1871
    %v1898 = vpop.xlane.xlu0 %1897
    %1899 = vadd.xlane.f32.xlu0 %v1872
    %v1900 = vpop.xlane.xlu0 %1899
    %1901 = vadd.xlane.f32.xlu0 %v1873
    %v1902 = vpop.xlane.xlu0 %1901
    %1903 = vadd.xlane.f32.xlu0 %v1874
    %v1904 = vpop.xlane.xlu0 %1903
    %1905 = vadd.xlane.f32.xlu0 %v1875
    %v1906 = vpop.xlane.xlu0 %1905
    %1907 = vadd.xlane.f32.xlu0 %v1876
    %v1908 = vpop.xlane.xlu0 %1907
    %s1909 = sld [smem:[#allocation2]]
    %v1910 = vstv %s1909
    %v1911 = vadd.f32 %v1878, %v1910
    %v1912 = vadd.f32 %v1880, %v1910
    %v1913 = vadd.f32 %v1882, %v1910
    %v1914 = vadd.f32 %v1884, %v1910
    %v1915 = vadd.f32 %v1886, %v1910
    %v1916 = vadd.f32 %v1888, %v1910
    %v1917 = vadd.f32 %v1890, %v1910
    %v1918 = vadd.f32 %v1892, %v1910
    %v1919 = vadd.f32 %v1894, %v1910
    %v1920 = vadd.f32 %v1896, %v1910
    %v1921 = vadd.f32 %v1898, %v1910
    %v1922 = vadd.f32 %v1900, %v1910
    %v1923 = vadd.f32 %v1902, %v1910
    %v1924 = vadd.f32 %v1904, %v1910
    %v1925 = vadd.f32 %v1906, %v1910
    %v1926 = vadd.f32 %v1908, %v1910
    %v1943 = vlaneseq
    %v1944 = vand.u32 %v1943, 127
    %v1945 = vlaneseq
    %v1946 = vshrl.u32 %v1945, 7
    %v1947 = vsub.s32 %v1944, %v1946
    %v1948 = vrot.slane %v1911, %v1947
    %v1949 = vadd.s32 %v1944, 4294967288
    %v1950 = vlaneseq
    %v1951 = vshrl.u32 %v1950, 7
    %v1952 = vsub.s32 %v1949, %v1951
    %v1953 = vrot.slane %v1912, %v1952
    %vm1954 = vcmask 130112
    %v1955 = vsel %vm1954, %v1953, %v1948
    %v1956 = vadd.s32 %v1944, 4294967280
    %v1957 = vlaneseq
    %v1958 = vshrl.u32 %v1957, 7
    %v1959 = vsub.s32 %v1956, %v1958
    %v1960 = vrot.slane %v1913, %v1959
    %vm1961 = vcmask 195712
    %v1962 = vsel %vm1961, %v1960, %v1955
    %v1963 = vadd.s32 %v1944, 4294967272
    %v1964 = vlaneseq
    %v1965 = vshrl.u32 %v1964, 7
    %v1966 = vsub.s32 %v1963, %v1965
    %v1967 = vrot.slane %v1914, %v1966
    %vm1968 = vcmask 261312
    %v1969 = vsel %vm1968, %v1967, %v1962
    %v1970 = vadd.s32 %v1944, 4294967264
    %v1971 = vlaneseq
    %v1972 = vshrl.u32 %v1971, 7
    %v1973 = vsub.s32 %v1970, %v1972
    %v1974 = vrot.slane %v1915, %v1973
    %vm1975 = vcmask 326912
    %v1976 = vsel %vm1975, %v1974, %v1969
    %v1977 = vadd.s32 %v1944, 4294967256
    %v1978 = vlaneseq
    %v1979 = vshrl.u32 %v1978, 7
    %v1980 = vsub.s32 %v1977, %v1979
    %v1981 = vrot.slane %v1916, %v1980
    %vm1982 = vcmask 392512
    %v1983 = vsel %vm1982, %v1981, %v1976
    %v1984 = vadd.s32 %v1944, 4294967248
    %v1985 = vlaneseq
    %v1986 = vshrl.u32 %v1985, 7
    %v1987 = vsub.s32 %v1984, %v1986
    %v1988 = vrot.slane %v1917, %v1987
    %vm1989 = vcmask 458112
    %v1990 = vsel %vm1989, %v1988, %v1983
    %v1991 = vadd.s32 %v1944, 4294967240
    %v1992 = vlaneseq
    %v1993 = vshrl.u32 %v1992, 7
    %v1994 = vsub.s32 %v1991, %v1993
    %v1995 = vrot.slane %v1918, %v1994
    %vm1996 = vcmask 523712
    %v1997 = vsel %vm1996, %v1995, %v1990
    %v1998 = vadd.s32 %v1944, 4294967232
    %v1999 = vlaneseq
    %v2000 = vshrl.u32 %v1999, 7
    %v2001 = vsub.s32 %v1998, %v2000
    %v2002 = vrot.slane %v1919, %v2001
    %vm2003 = vcmask 589312
    %v2004 = vsel %vm2003, %v2002, %v1997
    %v2005 = vadd.s32 %v1944, 4294967224
    %v2006 = vlaneseq
    %v2007 = vshrl.u32 %v2006, 7
    %v2008 = vsub.s32 %v2005, %v2007
    %v2009 = vrot.slane %v1920, %v2008
    %vm2010 = vcmask 654912
    %v2011 = vsel %vm2010, %v2009, %v2004
    %v2012 = vadd.s32 %v1944, 4294967216
    %v2013 = vlaneseq
    %v2014 = vshrl.u32 %v2013, 7
    %v2015 = vsub.s32 %v2012, %v2014
    %v2016 = vrot.slane %v1921, %v2015
    %vm2017 = vcmask 720512
    %v2018 = vsel %vm2017, %v2016, %v2011
    %v2019 = vadd.s32 %v1944, 4294967208
    %v2020 = vlaneseq
    %v2021 = vshrl.u32 %v2020, 7
    %v2022 = vsub.s32 %v2019, %v2021
    %v2023 = vrot.slane %v1922, %v2022
    %vm2024 = vcmask 786112
    %v2025 = vsel %vm2024, %v2023, %v2018
    %v2026 = vadd.s32 %v1944, 4294967200
    %v2027 = vlaneseq
    %v2028 = vshrl.u32 %v2027, 7
    %v2029 = vsub.s32 %v2026, %v2028
    %v2030 = vrot.slane %v1923, %v2029
    %vm2031 = vcmask 851712
    %v2032 = vsel %vm2031, %v2030, %v2025
    %v2033 = vadd.s32 %v1944, 4294967192
    %v2034 = vlaneseq
    %v2035 = vshrl.u32 %v2034, 7
    %v2036 = vsub.s32 %v2033, %v2035
    %v2037 = vrot.slane %v1924, %v2036
    %vm2038 = vcmask 917312
    %v2039 = vsel %vm2038, %v2037, %v2032
    %v2040 = vadd.s32 %v1944, 4294967184
    %v2041 = vlaneseq
    %v2042 = vshrl.u32 %v2041, 7
    %v2043 = vsub.s32 %v2040, %v2042
    %v2044 = vrot.slane %v1925, %v2043
    %vm2045 = vcmask 982912
    %v2046 = vsel %vm2045, %v2044, %v2039
    %v2047 = vadd.s32 %v1944, 4294967176
    %v2048 = vlaneseq
    %v2049 = vshrl.u32 %v2048, 7
    %v2050 = vsub.s32 %v2047, %v2049
    %v2051 = vrot.slane %v1926, %v2050
    %vm2052 = vcmask 1048512
    %v2053 = vsel %vm2052, %v2051, %v2046
    %2055 = vst [vmem:[#allocation9] sm:$0x1] %v2053
    // Predicated region
    $region42: #{tpu_custom_call.1} parent=1 // pred_check
      _
    $region43: #{tpu_custom_call.1} parent=1 // pred_check_branch
      %2057 = sbr.rel (0) target = $region45
    $region44: #{tpu_custom_call.1} parent=1 // pred_region
      %s2059 = ssub.s32 16, 16
      %2060 = vsyncadd [#allocation5], %s2059
      %s2062 = sshll.u32 [#allocation9], 4
      %s2063 = int_to_ptr.vmem [resolvable:$true] %s2062
      %2065 = dma.vmem_to_hbm [thread:$0]  %s2063, 16, %s7, [#allocation5]
    $region45: #{tpu_custom_call.1} parent=1 // pred_fallthru
      _
    // Predicated region
    $region46: #{tpu_custom_call.1} parent=1 // pred_check
      _
    $region47: #{tpu_custom_call.1} parent=1 // pred_check_branch
      %2067 = sbr.rel (0) target = $region49
    $region48: #{tpu_custom_call.1} parent=1 // pred_region
      %2068 = dma.done [#allocation5], 16
    $region49: #{tpu_custom_call.1} parent=1 // pred_fallthru
      _
    %2069 = vsyncpa [#allocation4], 1
    %2070 = vsyncpa [#allocation7], 1
    %2071 = vsyncpa [#allocation5], 1

</llo_original>
